<compile_context>
chip_gen: v7x
topology: tpu7x:2x2x1
jax: 0.10.0
libtpu: 0.0.40
codegen_flags: <defaults>
</compile_context>

<pallas_src>
import functools

import numpy as np

import jax
import jax.numpy as jnp
from jax.experimental import pallas as pl
from jax.experimental.pallas import tpu as pltpu

LANE = 128


def _round_up(x, m):
    return (x + m - 1) // m * m


# ----------------------------------------------------------------------------
# Kernels
# ----------------------------------------------------------------------------
def _conv_pool_kernel(x_ref, w_ref, b_ref, *out_refs, emit_fmaps):
    """One fused step: 3x3 conv (single MXU matmul) + bias + ReLU + 2x2 max-pool.

    x_ref : (M, K)      bf16  - K = 16*cin_pad lanes holding the (plane, shift)
                                stacked taps for every output position.
    w_ref : (K, 4*128)  bf16  - per-output-parity-plane tap weights (zero blocks
                                where a (plane, shift) combo is unused).
    b_ref : (1, 4*128)  f32
    outs  : [fmaps (M, 4*128) f32], pooled (M, 128) bf16
    """
    if emit_fmaps:
        fm_ref, pool_ref = out_refs
    else:
        (pool_ref,) = out_refs

    acc = jnp.dot(x_ref[...], w_ref[...], preferred_element_type=jnp.float32)
    acc = jnp.maximum(acc + b_ref[...], 0.0)            # f32 epilogue (v5e-safe)
    if emit_fmaps:
        fm_ref[...] = acc                               # lane-dense (M, 512) store
    # 2x2 max-pool == elementwise max of the four 128-aligned parity lane blocks.
    pooled = jnp.maximum(jnp.maximum(acc[:, 0:LANE], acc[:, LANE:2 * LANE]),
                         jnp.maximum(acc[:, 2 * LANE:3 * LANE], acc[:, 3 * LANE:]))
    pool_ref[...] = pooled.astype(pool_ref.dtype)


def _conv_pool_head_kernel(x_ref, w_ref, b_ref, sel_ref, fcw_ref, fcb_ref,
                           *out_refs, emit_fmaps):
    """Conv block + fused GlobalAvgPool + SimpleLinear head.

    sel_ref : (B, M) f32 - constant per-image GAP selector (1/(Hp*Wp) at valid
              pooled rows, 0 at junk-column / pad rows), so GAP is one matmul.
    fcw_ref : (128, 128) f32 (fc weight^T, zero-padded), fcb_ref: (1, 128) f32.
    outs    : [fmaps (M, 4*128) f32], features (B, 128) f32, logits (B, 128) f32
    """
    if emit_fmaps:
        fm_ref, feat_ref, logit_ref = out_refs
    else:
        feat_ref, logit_ref = out_refs

    acc = jnp.dot(x_ref[...], w_ref[...], preferred_element_type=jnp.float32)
    acc = jnp.maximum(acc + b_ref[...], 0.0)
    if emit_fmaps:
        fm_ref[...] = acc
    pooled = jnp.maximum(jnp.maximum(acc[:, 0:LANE], acc[:, LANE:2 * LANE]),
                         jnp.maximum(acc[:, 2 * LANE:3 * LANE], acc[:, 3 * LANE:]))
    feats = jnp.dot(sel_ref[...], pooled, preferred_element_type=jnp.float32)
    feat_ref[...] = feats
    logit_ref[...] = (jnp.dot(feats, fcw_ref[...],
                              preferred_element_type=jnp.float32) + fcb_ref[...])


# ----------------------------------------------------------------------------
# Wrapper: operand / weight staging (cheap XLA on the *small* tensors) + call
# ----------------------------------------------------------------------------
def _build_conv_weight(w_oihw, cin_chunk):
    """(cout, cin, 3, 3) -> (16*cin_chunk, 4*128) bf16.

    Row blocks are ordered (row-parity rp, col-parity cp, row-shift rs, col-shift cs)
    to match the operand's K stacking; column blocks are the 4 output parity planes
    (ph, pw).  A (rp, cp, rs, cs) block is the tap weight W[dy, dx] with
    dy = 2*rs+rp-ph, dx = 2*cs+cp-pw when that tap exists, else zeros.
    """
    cout, cin = w_oihw.shape[0], w_oihw.shape[1]
    zeros_blk = jnp.zeros((cin_chunk, LANE), jnp.float32)
    cols = []
    for ph in (0, 1):
        for pw in (0, 1):
            blocks = []
            for rp in (0, 1):
                for cp in (0, 1):
                    for rs in (0, 1):
                        for cs in (0, 1):
                            dy = 2 * rs + rp - ph
                            dx = 2 * cs + cp - pw
                            if 0 <= dy <= 2 and 0 <= dx <= 2:
                                wt = jnp.transpose(w_oihw[:, :, dy, dx])  # (cin, cout)
                                wt = jnp.pad(wt.astype(jnp.float32),
                                             ((0, cin_chunk - cin), (0, LANE - cout)))
                                blocks.append(wt)
                            else:
                                blocks.append(zeros_blk)
            cols.append(jnp.concatenate(blocks, axis=0))        # (16*cin_chunk, 128)
    return jnp.concatenate(cols, axis=1).astype(jnp.bfloat16)   # (16*cin_chunk, 512)


def _conv_block(x_nhwc, w_oihw, bias, *, batch_block, emit_fmaps, head=None):
    """3x3 'SAME' conv + bias + ReLU + 2x2 max-pool (+ optional fused GAP+fc head).

    Returns (pallas outputs tuple, geometry dict).
    """
    n, h, w, cin = x_nhwc.shape
    cout = w_oihw.shape[0]
    assert h % 2 == 0 and w % 2 == 0 and cout <= LANE

    B = batch_block
    grid = pl.cdiv(n, B)
    n_pad = grid * B
    hq, wq = h // 2 + 1, w // 2 + 1
    mout = (h // 2) * wq                        # flat rows per image (col wq-1 is junk)
    lpad = _round_up(mout, 8)                   # per-image row stride (sublane aligned)
    mrows = B * lpad                            # matmul M per grid step
    cin_chunk = _round_up(cin, 8)
    kdim = 16 * cin_chunk                       # 128 (conv1) / 512 (conv2): lane aligned

    # ---- XLA prep: pad, parity-split, stack the 16 (plane, shift) chunks on K.
    # This is the whole "im2col"; at these shapes it is ~50 KB of bf16 per layer,
    # so its HBM cost is negligible while the kernel needs zero relayout.
    xp = jnp.pad(x_nhwc, ((0, n_pad - n), (1, 1), (1, 1), (0, cin_chunk - cin)))
    chunks = []
    for rp in (0, 1):
        for cp in (0, 1):
            pln = xp[:, rp::2, cp::2, :].reshape(n_pad, hq * wq, cin_chunk)
            pln = jnp.pad(pln, ((0, 0), (0, wq + 2), (0, 0)))
            for s in (0, 1, wq, wq + 1):        # (rs, cs) = (0,0),(0,1),(1,0),(1,1)
                chunks.append(pln[:, s:s + mout, :])
    xk = jnp.concatenate(chunks, axis=-1)                       # (n_pad, mout, kdim)
    xk = jnp.pad(xk, ((0, 0), (0, lpad - mout), (0, 0)))
    xk = xk.reshape(n_pad * lpad, kdim).astype(jnp.bfloat16)

    wk = _build_conv_weight(w_oihw, cin_chunk)                  # (kdim, 512) bf16
    bk = jnp.tile(jnp.pad(bias.astype(jnp.float32), (0, LANE - cout)), 4)
    bk = bk.reshape(1, 4 * LANE)

    in_specs = [
        pl.BlockSpec((mrows, kdim), lambda i: (i, 0)),          # batch-block of images
        pl.BlockSpec((kdim, 4 * LANE), lambda i: (0, 0)),       # weights stay resident
        pl.BlockSpec((1, 4 * LANE), lambda i: (0, 0)),
    ]
    inputs = [xk, wk, bk]

    out_shapes, out_specs = [], []
    if emit_fmaps:
        out_shapes.append(jax.ShapeDtypeStruct((grid, mrows, 4 * LANE), jnp.float32))
        out_specs.append(pl.BlockSpec((None, mrows, 4 * LANE), lambda i: (i, 0, 0)))

    if head is None:
        kernel = functools.partial(_conv_pool_kernel, emit_fmaps=emit_fmaps)
        out_shapes.append(jax.ShapeDtypeStruct((grid, mrows, LANE), jnp.bfloat16))
        out_specs.append(pl.BlockSpec((None, mrows, LANE), lambda i: (i, 0, 0)))
    else:
        fc_w, fc_b = head
        nb, fdim = fc_w.shape
        assert fdim == cout
        fcw = jnp.pad(jnp.transpose(fc_w).astype(jnp.float32),
                      ((0, LANE - fdim), (0, LANE - nb)))       # (128, 128)
        fcb = jnp.pad(fc_b.astype(jnp.float32), (0, LANE - nb)).reshape(1, LANE)
        # Constant per-image GAP selector over the flat pooled rows.
        sel_np = np.zeros((B, mrows), np.float32)
        inv = 1.0 / ((h // 2) * (w // 2))
        for j in range(B):
            for r in range(h // 2):
                for c in range(w // 2):
                    sel_np[j, j * lpad + r * wq + c] = inv
        inputs += [jnp.asarray(sel_np), fcw, fcb]
        in_specs += [pl.BlockSpec((B, mrows), lambda i: (0, 0)),
                     pl.BlockSpec((LANE, LANE), lambda i: (0, 0)),
                     pl.BlockSpec((1, LANE), lambda i: (0, 0))]
        kernel = functools.partial(_conv_pool_head_kernel, emit_fmaps=emit_fmaps)
        out_shapes += [jax.ShapeDtypeStruct((grid, B, LANE), jnp.float32),
                       jax.ShapeDtypeStruct((grid, B, LANE), jnp.float32)]
        out_specs += [pl.BlockSpec((None, B, LANE), lambda i: (i, 0, 0)),
                      pl.BlockSpec((None, B, LANE), lambda i: (i, 0, 0))]

    outs = pl.pallas_call(
        kernel,
        out_shape=tuple(out_shapes),
        grid=(grid,),
        in_specs=in_specs,
        out_specs=tuple(out_specs),
        compiler_params=pltpu.CompilerParams(
            # batch-block axis shards across v7x's 2 TensorCores.
            dimension_semantics=("parallel",),
            # ~1-2 MiB/step at batch_block<=8; 32 MiB is safe on v5e/v6e/v7x.
            vmem_limit_bytes=32 * 1024 * 1024),
    )(*inputs)

    geom = dict(n=n, n_pad=n_pad, grid=grid, B=B, lpad=lpad, mout=mout,
                wq=wq, h=h, w=w, cout=cout)
    return outs, geom


# ----------------------------------------------------------------------------
# Layout-only reconstructions (cheap XLA on small tensors)
# ----------------------------------------------------------------------------
def _fmaps_to_nchw(fm, g):
    G, B, lpad, mout = g["grid"], g["B"], g["lpad"], g["mout"]
    h, w, wq, cout = g["h"], g["w"], g["wq"], g["cout"]
    f = fm.reshape(G, B, lpad, 2, 2, LANE)[:, :, :mout, :, :, :cout]
    f = f.reshape(G, B, h // 2, wq, 2, 2, cout)[:, :, :, : w // 2, :, :, :]
    # (G, B, r, c, ph, pw, C) -> (G, B, r, ph, c, pw, C)
    f = jnp.transpose(f, (0, 1, 2, 4, 3, 5, 6))
    f = f.reshape(G * B, h, w, cout)[: g["n"]]
    return jnp.transpose(f, (0, 3, 1, 2))                       # NCHW


def _pooled_to_nhwc(pooled, g):
    p = pooled.reshape(g["grid"], g["B"], g["lpad"], LANE)[:, :, : g["mout"], : g["cout"]]
    p = p.reshape(g["grid"], g["B"], g["h"] // 2, g["wq"], g["cout"])
    p = p[:, :, :, : g["w"] // 2, :]
    return p.reshape(g["n_pad"], g["h"] // 2, g["w"] // 2, g["cout"])[: g["n"]]


# ----------------------------------------------------------------------------
# IncrementalNet (conv2 backbone + SimpleLinear fc)
# ----------------------------------------------------------------------------
def init_params(key, in_channels=3, nb_classes=10):
    k1, k2, k3, k4, k5, k6 = jax.random.split(key, 6)
    c1, c2 = 32, 64
    return {
        "conv1_w": jax.random.normal(k1, (c1, in_channels, 3, 3), jnp.float32) * 0.1,
        "conv1_b": jax.random.normal(k2, (c1,), jnp.float32) * 0.01,
        "conv2_w": jax.random.normal(k3, (c2, c1, 3, 3), jnp.float32) * 0.1,
        "conv2_b": jax.random.normal(k4, (c2,), jnp.float32) * 0.01,
        "fc_w": jax.random.normal(k5, (nb_classes, c2), jnp.float32) * 0.1,
        "fc_b": jax.random.normal(k6, (nb_classes,), jnp.float32) * 0.01,
    }


def incremental_net_forward(params, x_nchw, *, want_fmaps=True, batch_block=8):
    """IncrementalNet.forward (gradcam=False path).

    x_nchw: (N, C, H, W) float32, PyTorch layout.
    Returns dict with 'fmaps', 'features', 'logits' (mirrors the torch module).
    """
    x = jnp.transpose(x_nchw, (0, 2, 3, 1)).astype(jnp.float32)  # NCHW -> NHWC
    n = x.shape[0]
    B = max(1, min(batch_block, n))

    # Conv block 1 (fused conv + bias + ReLU + pool)
    outs1, g1 = _conv_block(x, params["conv1_w"], params["conv1_b"],
                            batch_block=B, emit_fmaps=want_fmaps)
    if want_fmaps:
        fm1, pooled1 = outs1
    else:
        (pooled1,) = outs1
        fm1 = None
    p1 = _pooled_to_nhwc(pooled1, g1)                            # (N, H/2, W/2, 32) bf16

    # Conv block 2 with fused GlobalAvgPool + SimpleLinear head
    outs2, g2 = _conv_block(p1, params["conv2_w"], params["conv2_b"],
                            batch_block=B, emit_fmaps=want_fmaps,
                            head=(params["fc_w"], params["fc_b"]))
    if want_fmaps:
        fm2, feats_p, logits_p = outs2
    else:
        feats_p, logits_p = outs2
        fm2 = None

    nb, fdim = params["fc_w"].shape
    features = feats_p.reshape(g2["n_pad"], LANE)[:n, :fdim]
    logits = logits_p.reshape(g2["n_pad"], LANE)[:n, :nb]

    out = {"features": features, "logits": logits}
    if want_fmaps:
        out["fmaps"] = [_fmaps_to_nchw(fm1, g1), _fmaps_to_nchw(fm2, g2)]
    else:
        out["fmaps"] = []
    # TODO(synk): gradcam hooks (backward-gradient capture) have no forward-only
    # Pallas equivalent; only the gradcam=False forward path is implemented.
    return out


# ----------------------------------------------------------------------------
# Pure-XLA f32 reference for a loose numerical check (kernel uses bf16 MXU ops)
# ----------------------------------------------------------------------------
def _reference_forward(params, x_nchw):
    def conv(x, w, b):
        y = jax.lax.conv_general_dilated(
            x, w, (1, 1), "SAME", dimension_numbers=("NCHW", "OIHW", "NCHW"))
        return jax.nn.relu(y + b[None, :, None, None])

    def pool(x):
        return jax.lax.reduce_window(x, -jnp.inf, jax.lax.max,
                                     (1, 1, 2, 2), (1, 1, 2, 2), "VALID")

    f1 = conv(x_nchw, params["conv1_w"], params["conv1_b"])
    p1 = pool(f1)
    f2 = conv(p1, params["conv2_w"], params["conv2_b"])
    p2 = pool(f2)
    feats = jnp.mean(p2, axis=(2, 3))
    logits = feats @ params["fc_w"].T + params["fc_b"]
    return f1, f2, feats, logits


if __name__ == "__main__":
    key = jax.random.PRNGKey(0)
    pkey, xkey = jax.random.split(key)
    params = init_params(pkey, in_channels=3, nb_classes=10)

    # Small deterministic input, PyTorch NCHW convention: batch=2, C=3, 16x16.
    x = jax.random.normal(xkey, (2, 3, 16, 16), jnp.float32)

    fwd = jax.jit(incremental_net_forward)
    out = jax.block_until_ready(fwd(params, x))

    assert out["logits"].shape == (2, 10)
    assert out["features"].shape == (2, 64)
    assert out["fmaps"][0].shape == (2, 32, 16, 16)
    assert out["fmaps"][1].shape == (2, 64, 8, 8)

    # Loose-tolerance correctness check vs. a plain-XLA f32 reference
    # (kernel activations/weights are bf16 with f32 accumulation).
    f1r, f2r, featr, logitr = _reference_forward(params, x)
    assert float(jnp.max(jnp.abs(out["fmaps"][0] - f1r))) < 0.1
    assert float(jnp.max(jnp.abs(out["fmaps"][1] - f2r))) < 0.1
    assert float(jnp.max(jnp.abs(out["features"] - featr))) < 0.1
    assert float(jnp.max(jnp.abs(out["logits"] - logitr))) < 0.1

    print("KERNEL_OK")
</pallas_src>

<mosaic_0001>
module attributes {stable_mosaic.version = 11 : i64} {
  func.func @_conv_pool_kernel(%arg0: i32, %arg1: memref<144x128xbf16, #tpu.memory_space<vmem>>, %arg2: memref<128x512xbf16, #tpu.memory_space<vmem>>, %arg3: memref<1x512xf32, #tpu.memory_space<vmem>>, %arg4: memref<1x144x512xf32, #tpu.memory_space<vmem>>, %arg5: memref<1x144x128xbf16, #tpu.memory_space<vmem>>) attributes {dimension_semantics = [#tpu.dimension_semantics<parallel>], iteration_bounds = array<i64: 1>, scalar_prefetch = 0 : i64, scratch_operands = 0 : i64, tpu.core_type = #tpu.core_type<tc>, window_params = [{transform_indices = @transform_0, window_bounds = array<i64: 144, 128>}, {pipeline_mode = #tpu.pipeline_mode<synchronous>, transform_indices = @transform_1, window_bounds = array<i64: 128, 512>}, {pipeline_mode = #tpu.pipeline_mode<synchronous>, transform_indices = @transform_2, window_bounds = array<i64: 1, 512>}, {transform_indices = @transform_3, window_bounds = array<i64: 1, 144, 512>}, {transform_indices = @transform_4, window_bounds = array<i64: 1, 144, 128>}]} {
    %c0 = arith.constant 0 : index
    %c0_0 = arith.constant 0 : index
    %0 = vector.load %arg1[%c0, %c0_0] : memref<144x128xbf16, #tpu.memory_space<vmem>>, vector<144x128xbf16>
    %c0_1 = arith.constant 0 : index
    %c0_2 = arith.constant 0 : index
    %1 = vector.load %arg2[%c0_1, %c0_2] : memref<128x512xbf16, #tpu.memory_space<vmem>>, vector<128x512xbf16>
    %cst = arith.constant dense<0.000000e+00> : vector<144x512xf32>
    %2 = tpu.matmul %0, %1, %cst {dimension_numbers = #tpu.dot_dimension_numbers<[1], [0], [0], [1], [0, 0, 1, 1], [], []>} : vector<144x128xbf16>, vector<128x512xbf16>, vector<144x512xf32> -> vector<144x512xf32>
    %c0_3 = arith.constant 0 : index
    %c0_4 = arith.constant 0 : index
    %3 = vector.load %arg3[%c0_3, %c0_4] : memref<1x512xf32, #tpu.memory_space<vmem>>, vector<1x512xf32>
    %4 = vector.broadcast %3 : vector<1x512xf32> to vector<144x512xf32>
    %5 = arith.addf %2, %4 : vector<144x512xf32>
    %cst_5 = arith.constant 0.000000e+00 : f32
    %6 = vector.broadcast %cst_5 : f32 to vector<144x512xf32>
    %7 = arith.maximumf %5, %6 : vector<144x512xf32>
    %c0_6 = arith.constant 0 : index
    %c0_7 = arith.constant 0 : index
    %c0_8 = arith.constant 0 : index
    %8 = vector.load %arg4[%c0_6, %c0_7, %c0_8] : memref<1x144x512xf32, #tpu.memory_space<vmem>>, vector<1x144x512xf32>
    %9 = vector.shape_cast %8 : vector<1x144x512xf32> to vector<144x512xf32>
    %10 = vector.shape_cast %7 : vector<144x512xf32> to vector<1x144x512xf32>
    tpu.vector_store %arg4[%c0_6, %c0_7, %c0_8], %10 {strides = array<i32>} : memref<1x144x512xf32, #tpu.memory_space<vmem>>, vector<1x144x512xf32>,
    %11 = vector.extract_strided_slice %7 {offsets = [0, 0], sizes = [144, 128], strides = [1, 1]} : vector<144x512xf32> to vector<144x128xf32>
    %12 = vector.extract_strided_slice %7 {offsets = [0, 128], sizes = [144, 128], strides = [1, 1]} : vector<144x512xf32> to vector<144x128xf32>
    %13 = arith.maximumf %11, %12 : vector<144x128xf32>
    %14 = vector.extract_strided_slice %7 {offsets = [0, 256], sizes = [144, 128], strides = [1, 1]} : vector<144x512xf32> to vector<144x128xf32>
    %15 = vector.extract_strided_slice %7 {offsets = [0, 384], sizes = [144, 128], strides = [1, 1]} : vector<144x512xf32> to vector<144x128xf32>
    %16 = arith.maximumf %14, %15 : vector<144x128xf32>
    %17 = arith.maximumf %13, %16 : vector<144x128xf32>
    %18 = arith.truncf %17 : vector<144x128xf32> to vector<144x128xbf16>
    %c0_9 = arith.constant 0 : index
    %c0_10 = arith.constant 0 : index
    %c0_11 = arith.constant 0 : index
    %19 = vector.load %arg5[%c0_9, %c0_10, %c0_11] : memref<1x144x128xbf16, #tpu.memory_space<vmem>>, vector<1x144x128xbf16>
    %20 = vector.shape_cast %19 : vector<1x144x128xbf16> to vector<144x128xbf16>
    %21 = vector.shape_cast %18 : vector<144x128xbf16> to vector<1x144x128xbf16>
    tpu.vector_store %arg5[%c0_9, %c0_10, %c0_11], %21 {strides = array<i32>} : memref<1x144x128xbf16, #tpu.memory_space<vmem>>, vector<1x144x128xbf16>,
    return
  }
  func.func @transform_0(%arg0: i32) -> (i32, i32) {
    %c0_i32 = arith.constant 0 : i32
    %c0_i32_0 = arith.constant 0 : i32
    return %arg0, %c0_i32 : i32, i32
  }
  func.func @transform_1(%arg0: i32) -> (i32, i32) {
    %c0_i32 = arith.constant 0 : i32
    %c0_i32_0 = arith.constant 0 : i32
    %c0_i32_1 = arith.constant 0 : i32
    return %c0_i32, %c0_i32_0 : i32, i32
  }
  func.func @transform_2(%arg0: i32) -> (i32, i32) {
    %c0_i32 = arith.constant 0 : i32
    %c0_i32_0 = arith.constant 0 : i32
    %c0_i32_1 = arith.constant 0 : i32
    return %c0_i32, %c0_i32_0 : i32, i32
  }
  func.func @transform_3(%arg0: i32) -> (i32, i32, i32) {
    %c0_i32 = arith.constant 0 : i32
    %c0_i32_0 = arith.constant 0 : i32
    %c0_i32_1 = arith.constant 0 : i32
    return %arg0, %c0_i32, %c0_i32_0 : i32, i32, i32
  }
  func.func @transform_4(%arg0: i32) -> (i32, i32, i32) {
    %c0_i32 = arith.constant 0 : i32
    %c0_i32_0 = arith.constant 0 : i32
    %c0_i32_1 = arith.constant 0 : i32
    return %arg0, %c0_i32, %c0_i32_0 : i32, i32, i32
  }
}

module attributes {stable_mosaic.version = 11 : i64} {
  func.func @_conv_pool_head_kernel(%arg0: i32, %arg1: memref<48x512xbf16, #tpu.memory_space<vmem>>, %arg2: memref<512x512xbf16, #tpu.memory_space<vmem>>, %arg3: memref<1x512xf32, #tpu.memory_space<vmem>>, %arg4: memref<2x48xf32, #tpu.memory_space<vmem>>, %arg5: memref<128x128xf32, #tpu.memory_space<vmem>>, %arg6: memref<1x128xf32, #tpu.memory_space<vmem>>, %arg7: memref<1x48x512xf32, #tpu.memory_space<vmem>>, %arg8: memref<1x2x128xf32, #tpu.memory_space<vmem>>, %arg9: memref<1x2x128xf32, #tpu.memory_space<vmem>>) attributes {dimension_semantics = [#tpu.dimension_semantics<parallel>], iteration_bounds = array<i64: 1>, scalar_prefetch = 0 : i64, scratch_operands = 0 : i64, tpu.core_type = #tpu.core_type<tc>, window_params = [{transform_indices = @transform_0, window_bounds = array<i64: 48, 512>}, {pipeline_mode = #tpu.pipeline_mode<synchronous>, transform_indices = @transform_1, window_bounds = array<i64: 512, 512>}, {pipeline_mode = #tpu.pipeline_mode<synchronous>, transform_indices = @transform_2, window_bounds = array<i64: 1, 512>}, {pipeline_mode = #tpu.pipeline_mode<synchronous>, transform_indices = @transform_3, window_bounds = array<i64: 2, 48>}, {pipeline_mode = #tpu.pipeline_mode<synchronous>, transform_indices = @transform_4, window_bounds = array<i64: 128, 128>}, {pipeline_mode = #tpu.pipeline_mode<synchronous>, transform_indices = @transform_5, window_bounds = array<i64: 1, 128>}, {transform_indices = @transform_6, window_bounds = array<i64: 1, 48, 512>}, {transform_indices = @transform_7, window_bounds = array<i64: 1, 2, 128>}, {transform_indices = @transform_8, window_bounds = array<i64: 1, 2, 128>}]} {
    %c0 = arith.constant 0 : index
    %c0_0 = arith.constant 0 : index
    %0 = vector.load %arg1[%c0, %c0_0] : memref<48x512xbf16, #tpu.memory_space<vmem>>, vector<48x512xbf16>
    %c0_1 = arith.constant 0 : index
    %c0_2 = arith.constant 0 : index
    %1 = vector.load %arg2[%c0_1, %c0_2] : memref<512x512xbf16, #tpu.memory_space<vmem>>, vector<512x512xbf16>
    %cst = arith.constant dense<0.000000e+00> : vector<48x512xf32>
    %2 = tpu.matmul %0, %1, %cst {dimension_numbers = #tpu.dot_dimension_numbers<[1], [0], [0], [1], [0, 0, 1, 1], [], []>} : vector<48x512xbf16>, vector<512x512xbf16>, vector<48x512xf32> -> vector<48x512xf32>
    %c0_3 = arith.constant 0 : index
    %c0_4 = arith.constant 0 : index
    %3 = vector.load %arg3[%c0_3, %c0_4] : memref<1x512xf32, #tpu.memory_space<vmem>>, vector<1x512xf32>
    %4 = vector.broadcast %3 : vector<1x512xf32> to vector<48x512xf32>
    %5 = arith.addf %2, %4 : vector<48x512xf32>
    %cst_5 = arith.constant 0.000000e+00 : f32
    %6 = vector.broadcast %cst_5 : f32 to vector<48x512xf32>
    %7 = arith.maximumf %5, %6 : vector<48x512xf32>
    %c0_6 = arith.constant 0 : index
    %c0_7 = arith.constant 0 : index
    %c0_8 = arith.constant 0 : index
    %8 = vector.load %arg7[%c0_6, %c0_7, %c0_8] : memref<1x48x512xf32, #tpu.memory_space<vmem>>, vector<1x48x512xf32>
    %9 = vector.shape_cast %8 : vector<1x48x512xf32> to vector<48x512xf32>
    %10 = vector.shape_cast %7 : vector<48x512xf32> to vector<1x48x512xf32>
    tpu.vector_store %arg7[%c0_6, %c0_7, %c0_8], %10 {strides = array<i32>} : memref<1x48x512xf32, #tpu.memory_space<vmem>>, vector<1x48x512xf32>,
    %11 = vector.extract_strided_slice %7 {offsets = [0, 0], sizes = [48, 128], strides = [1, 1]} : vector<48x512xf32> to vector<48x128xf32>
    %12 = vector.extract_strided_slice %7 {offsets = [0, 128], sizes = [48, 128], strides = [1, 1]} : vector<48x512xf32> to vector<48x128xf32>
    %13 = arith.maximumf %11, %12 : vector<48x128xf32>
    %14 = vector.extract_strided_slice %7 {offsets = [0, 256], sizes = [48, 128], strides = [1, 1]} : vector<48x512xf32> to vector<48x128xf32>
    %15 = vector.extract_strided_slice %7 {offsets = [0, 384], sizes = [48, 128], strides = [1, 1]} : vector<48x512xf32> to vector<48x128xf32>
    %16 = arith.maximumf %14, %15 : vector<48x128xf32>
    %17 = arith.maximumf %13, %16 : vector<48x128xf32>
    %c0_9 = arith.constant 0 : index
    %c0_10 = arith.constant 0 : index
    %18 = vector.load %arg4[%c0_9, %c0_10] : memref<2x48xf32, #tpu.memory_space<vmem>>, vector<2x48xf32>
    %cst_11 = arith.constant dense<0.000000e+00> : vector<2x128xf32>
    %19 = tpu.matmul %18, %17, %cst_11 {dimension_numbers = #tpu.dot_dimension_numbers<[1], [0], [0], [1], [0, 0, 1, 1], [], []>} : vector<2x48xf32>, vector<48x128xf32>, vector<2x128xf32> -> vector<2x128xf32>
    %c0_12 = arith.constant 0 : index
    %c0_13 = arith.constant 0 : index
    %c0_14 = arith.constant 0 : index
    %20 = vector.load %arg8[%c0_12, %c0_13, %c0_14] : memref<1x2x128xf32, #tpu.memory_space<vmem>>, vector<1x2x128xf32>
    %21 = vector.shape_cast %20 : vector<1x2x128xf32> to vector<2x128xf32>
    %22 = vector.shape_cast %19 : vector<2x128xf32> to vector<1x2x128xf32>
    tpu.vector_store %arg8[%c0_12, %c0_13, %c0_14], %22 {strides = array<i32>} : memref<1x2x128xf32, #tpu.memory_space<vmem>>, vector<1x2x128xf32>,
    %c0_15 = arith.constant 0 : index
    %c0_16 = arith.constant 0 : index
    %23 = vector.load %arg5[%c0_15, %c0_16] : memref<128x128xf32, #tpu.memory_space<vmem>>, vector<128x128xf32>
    %cst_17 = arith.constant dense<0.000000e+00> : vector<2x128xf32>
    %24 = tpu.matmul %19, %23, %cst_17 {dimension_numbers = #tpu.dot_dimension_numbers<[1], [0], [0], [1], [0, 0, 1, 1], [], []>} : vector<2x128xf32>, vector<128x128xf32>, vector<2x128xf32> -> vector<2x128xf32>
    %c0_18 = arith.constant 0 : index
    %c0_19 = arith.constant 0 : index
    %25 = vector.load %arg6[%c0_18, %c0_19] : memref<1x128xf32, #tpu.memory_space<vmem>>, vector<1x128xf32>
    %26 = vector.broadcast %25 : vector<1x128xf32> to vector<2x128xf32>
    %27 = arith.addf %24, %26 : vector<2x128xf32>
    %c0_20 = arith.constant 0 : index
    %c0_21 = arith.constant 0 : index
    %c0_22 = arith.constant 0 : index
    %28 = vector.load %arg9[%c0_20, %c0_21, %c0_22] : memref<1x2x128xf32, #tpu.memory_space<vmem>>, vector<1x2x128xf32>
    %29 = vector.shape_cast %28 : vector<1x2x128xf32> to vector<2x128xf32>
    %30 = vector.shape_cast %27 : vector<2x128xf32> to vector<1x2x128xf32>
    tpu.vector_store %arg9[%c0_20, %c0_21, %c0_22], %30 {strides = array<i32>} : memref<1x2x128xf32, #tpu.memory_space<vmem>>, vector<1x2x128xf32>,
    return
  }
  func.func @transform_0(%arg0: i32) -> (i32, i32) {
    %c0_i32 = arith.constant 0 : i32
    %c0_i32_0 = arith.constant 0 : i32
    return %arg0, %c0_i32 : i32, i32
  }
  func.func @transform_1(%arg0: i32) -> (i32, i32) {
    %c0_i32 = arith.constant 0 : i32
    %c0_i32_0 = arith.constant 0 : i32
    %c0_i32_1 = arith.constant 0 : i32
    return %c0_i32, %c0_i32_0 : i32, i32
  }
  func.func @transform_2(%arg0: i32) -> (i32, i32) {
    %c0_i32 = arith.constant 0 : i32
    %c0_i32_0 = arith.constant 0 : i32
    %c0_i32_1 = arith.constant 0 : i32
    return %c0_i32, %c0_i32_0 : i32, i32
  }
  func.func @transform_3(%arg0: i32) -> (i32, i32) {
    %c0_i32 = arith.constant 0 : i32
    %c0_i32_0 = arith.constant 0 : i32
    %c0_i32_1 = arith.constant 0 : i32
    return %c0_i32, %c0_i32_0 : i32, i32
  }
  func.func @transform_4(%arg0: i32) -> (i32, i32) {
    %c0_i32 = arith.constant 0 : i32
    %c0_i32_0 = arith.constant 0 : i32
    %c0_i32_1 = arith.constant 0 : i32
    return %c0_i32, %c0_i32_0 : i32, i32
  }
  func.func @transform_5(%arg0: i32) -> (i32, i32) {
    %c0_i32 = arith.constant 0 : i32
    %c0_i32_0 = arith.constant 0 : i32
    %c0_i32_1 = arith.constant 0 : i32
    return %c0_i32, %c0_i32_0 : i32, i32
  }
  func.func @transform_6(%arg0: i32) -> (i32, i32, i32) {
    %c0_i32 = arith.constant 0 : i32
    %c0_i32_0 = arith.constant 0 : i32
    %c0_i32_1 = arith.constant 0 : i32
    return %arg0, %c0_i32, %c0_i32_0 : i32, i32, i32
  }
  func.func @transform_7(%arg0: i32) -> (i32, i32, i32) {
    %c0_i32 = arith.constant 0 : i32
    %c0_i32_0 = arith.constant 0 : i32
    %c0_i32_1 = arith.constant 0 : i32
    return %arg0, %c0_i32, %c0_i32_0 : i32, i32, i32
  }
  func.func @transform_8(%arg0: i32) -> (i32, i32, i32) {
    %c0_i32 = arith.constant 0 : i32
    %c0_i32_0 = arith.constant 0 : i32
    %c0_i32_1 = arith.constant 0 : i32
    return %arg0, %c0_i32, %c0_i32_0 : i32, i32, i32
  }
}

</mosaic_0001>

<llo_original>
// kernel: tile.13
$region0: #{tile.13}
  #allocation0 [shape = 's32[1]{0}', space=sflag, size = 0x4, scoped, tag = 'scoped memory for tile.13']
  %s0 = inlined_call_operand.vmem [shape: f32[128], index: 0, kind: input, shape index: {}]
  %s1 = inlined_call_operand.vmem [shape: f32[4,128], index: 1, kind: output, shape index: {}]
  // Predicated region
  $region2: #{tile.13} parent=0 // pred_check
    _
  $region3: #{tile.13} parent=0 // pred_check_branch
    %3 = sbr.rel (0) target = $region5
  $region4: #{tile.13} parent=0 // pred_region
    _
  $region5: #{tile.13} parent=0 // pred_fallthru
    _
  %v4 = vld [vmem:[%s0] ss:$0 sm:$0xff]
  %5 = vst [vmem:[%s1] sm:$0xf] %v4

// kernel: incremental_net_forward.2
$region0: #{incremental_net_forward.2}
  #allocation0 [shape = 'u32[]', space=smem, size = 0x4, offset = 0x4, fixed_abs, tag = 'smem constant byte address 0x4 - core index']
  #allocation1 [shape = 'u32[144,128]{1,0:T(1,128)}', space=vmem, size = 0x12000, scoped, tag = 'internal scratch']
  %s0 = inlined_call_operand.vmem [shape: bf16[144,128], index: 0, kind: input, shape index: {}]
  %s1 = inlined_call_operand.vmem [shape: bf16[128,512], index: 1, kind: input, shape index: {}]
  %s2 = inlined_call_operand.vmem [shape: f32[1,512], index: 2, kind: input, shape index: {}]
  %s3 = inlined_call_operand.vmem [shape: f32[1,144,512], index: 3, kind: output, shape index: {0}]
  %s4 = inlined_call_operand.vmem [shape: bf16[1,144,128], index: 4, kind: output, shape index: {1}]
  %5 = xla_tuple %s3, %s4
  %s6 = sld [smem:[#allocation0]]
  $region30: #{incremental_net_forward.2} parent=0
    _
  %s8 = ssub.s32 1, %s6
  %s9 = scalar_select 0, %s8, %s6
  // Predicated region
  $region2: #{incremental_net_forward.2} parent=0 // pred_check
    _
  $region3: #{incremental_net_forward.2} parent=0 // pred_check_branch
    %11 = sbr.rel (0) target = $region5
  $region4: #{incremental_net_forward.2} parent=0 // pred_region
    _
  $region5: #{incremental_net_forward.2} parent=0 // pred_fallthru
    _
  // Predicated region
  $region6: #{incremental_net_forward.2} parent=0 // pred_check
    _
  $region7: #{incremental_net_forward.2} parent=0 // pred_check_branch
    %13 = sbr.rel (0) target = $region9
  $region8: #{incremental_net_forward.2} parent=0 // pred_region
    _
  $region9: #{incremental_net_forward.2} parent=0 // pred_fallthru
    _
  // Predicated region
  $region10: #{incremental_net_forward.2} parent=0 // pred_check
    _
  $region11: #{incremental_net_forward.2} parent=0 // pred_check_branch
    %15 = sbr.rel (0) target = $region13
  $region12: #{incremental_net_forward.2} parent=0 // pred_region
    _
  $region13: #{incremental_net_forward.2} parent=0 // pred_fallthru
    _
  %v17 = vld [vmem:[%s0] sm:$0xf]
  %v18 = vld [vmem:[%s0 + $0x4] sm:$0xf]
  %v19 = vld [vmem:[%s0 + $0x8] sm:$0xf]
  %v20 = vld [vmem:[%s0 + $0xc] sm:$0xf]
  %v21 = vld [vmem:[%s0 + $0x10] sm:$0xf]
  %v22 = vld [vmem:[%s0 + $0x14] sm:$0xf]
  %v23 = vld [vmem:[%s0 + $0x18] sm:$0xf]
  %v24 = vld [vmem:[%s0 + $0x1c] sm:$0xf]
  %v25 = vld [vmem:[%s0 + $0x20] sm:$0xf]
  %v26 = vld [vmem:[%s0 + $0x24] sm:$0xf]
  %v27 = vld [vmem:[%s0 + $0x28] sm:$0xf]
  %v28 = vld [vmem:[%s0 + $0x2c] sm:$0xf]
  %v29 = vld [vmem:[%s0 + $0x30] sm:$0xf]
  %v30 = vld [vmem:[%s0 + $0x34] sm:$0xf]
  %v31 = vld [vmem:[%s0 + $0x38] sm:$0xf]
  %v32 = vld [vmem:[%s0 + $0x3c] sm:$0xf]
  %v33 = vld [vmem:[%s0 + $0x40] sm:$0xf]
  %v34 = vld [vmem:[%s0 + $0x44] sm:$0xf]
  %v35 = vld [vmem:[%s1] sm:$0xff]
  %v36 = vld [vmem:[%s1 + $0x8] sm:$0xff]
  %v37 = vld [vmem:[%s1 + $0x10] sm:$0xff]
  %v38 = vld [vmem:[%s1 + $0x18] sm:$0xff]
  %v39 = vld [vmem:[%s1 + $0x20] sm:$0xff]
  %v40 = vld [vmem:[%s1 + $0x28] sm:$0xff]
  %v41 = vld [vmem:[%s1 + $0x30] sm:$0xff]
  %v42 = vld [vmem:[%s1 + $0x38] sm:$0xff]
  %v43 = vld [vmem:[%s1 + $0x40] sm:$0xff]
  %v44 = vld [vmem:[%s1 + $0x48] sm:$0xff]
  %v45 = vld [vmem:[%s1 + $0x50] sm:$0xff]
  %v46 = vld [vmem:[%s1 + $0x58] sm:$0xff]
  %v47 = vld [vmem:[%s1 + $0x60] sm:$0xff]
  %v48 = vld [vmem:[%s1 + $0x68] sm:$0xff]
  %v49 = vld [vmem:[%s1 + $0x70] sm:$0xff]
  %v50 = vld [vmem:[%s1 + $0x78] sm:$0xff]
  %v51 = vld [vmem:[%s1 + $0x80] sm:$0xff]
  %v52 = vld [vmem:[%s1 + $0x88] sm:$0xff]
  %v53 = vld [vmem:[%s1 + $0x90] sm:$0xff]
  %v54 = vld [vmem:[%s1 + $0x98] sm:$0xff]
  %v55 = vld [vmem:[%s1 + $0xa0] sm:$0xff]
  %v56 = vld [vmem:[%s1 + $0xa8] sm:$0xff]
  %v57 = vld [vmem:[%s1 + $0xb0] sm:$0xff]
  %v58 = vld [vmem:[%s1 + $0xb8] sm:$0xff]
  %v59 = vld [vmem:[%s1 + $0xc0] sm:$0xff]
  %v60 = vld [vmem:[%s1 + $0xc8] sm:$0xff]
  %v61 = vld [vmem:[%s1 + $0xd0] sm:$0xff]
  %v62 = vld [vmem:[%s1 + $0xd8] sm:$0xff]
  %v63 = vld [vmem:[%s1 + $0xe0] sm:$0xff]
  %v64 = vld [vmem:[%s1 + $0xe8] sm:$0xff]
  %v65 = vld [vmem:[%s1 + $0xf0] sm:$0xff]
  %v66 = vld [vmem:[%s1 + $0xf8] sm:$0xff]
  %v67 = vld [vmem:[%s2] sm:$0xf]
  %v69 = vlaneseq
  %v70 = vshrl.u32 %v69, 7
  %v71 = vsub.s32 0, %v70
  %v72 = vrot.slane %v67, %v71
  %v73 = vlaneseq
  %v74 = vshrl.u32 %v73, 7
  %v75 = vsub.s32 1, %v74
  %v76 = vrot.slane %v67, %v75
  %v77 = vlaneseq
  %v78 = vshrl.u32 %v77, 7
  %v79 = vsub.s32 2, %v78
  %v80 = vrot.slane %v67, %v79
  %v81 = vlaneseq
  %v82 = vshrl.u32 %v81, 7
  %v83 = vsub.s32 3, %v82
  %v84 = vrot.slane %v67, %v83
  %v107 = vunpack.c.l.b16 %v17
  %v108 = vunpack.c.l.b16 %v18
  %v109 = vunpack.c.l.b16 %v19
  %v110 = vunpack.c.l.b16 %v20
  %v111 = vunpack.c.l.b16 %v21
  %v112 = vunpack.c.l.b16 %v22
  %v113 = vunpack.c.l.b16 %v23
  %v114 = vunpack.c.l.b16 %v24
  %v115 = vunpack.c.l.b16 %v25
  %v116 = vunpack.c.l.b16 %v26
  %v117 = vunpack.c.l.b16 %v27
  %v118 = vunpack.c.l.b16 %v28
  %v119 = vunpack.c.l.b16 %v29
  %v120 = vunpack.c.l.b16 %v30
  %v121 = vunpack.c.l.b16 %v31
  %v122 = vunpack.c.l.b16 %v32
  %v123 = vunpack.c.l.b16 %v33
  %v124 = vunpack.c.l.b16 %v34
  %v125 = vpack.c.b16 %v108, %v107
  %v126 = vpack.c.b16 %v110, %v109
  %v127 = vpack.c.b16 %v112, %v111
  %v128 = vpack.c.b16 %v114, %v113
  %v129 = vpack.c.b16 %v116, %v115
  %v130 = vpack.c.b16 %v118, %v117
  %v131 = vpack.c.b16 %v120, %v119
  %v132 = vpack.c.b16 %v122, %v121
  %v133 = vpack.c.b16 %v124, %v123
  %v175 = vunpack.c.l.b16 %v35
  %v176 = vunpack.c.h.b16 %v35
  %v177 = vunpack.c.l.b16 %v36
  %v178 = vunpack.c.h.b16 %v36
  %v179 = vunpack.c.l.b16 %v37
  %v180 = vunpack.c.h.b16 %v37
  %v181 = vunpack.c.l.b16 %v38
  %v182 = vunpack.c.h.b16 %v38
  %v183 = vunpack.c.l.b16 %v39
  %v184 = vunpack.c.h.b16 %v39
  %v185 = vunpack.c.l.b16 %v40
  %v186 = vunpack.c.h.b16 %v40
  %v187 = vunpack.c.l.b16 %v41
  %v188 = vunpack.c.h.b16 %v41
  %v189 = vunpack.c.l.b16 %v42
  %v190 = vunpack.c.h.b16 %v42
  %v191 = vunpack.c.l.b16 %v43
  %v192 = vunpack.c.h.b16 %v43
  %v193 = vunpack.c.l.b16 %v44
  %v194 = vunpack.c.h.b16 %v44
  %v195 = vunpack.c.l.b16 %v45
  %v196 = vunpack.c.h.b16 %v45
  %v197 = vunpack.c.l.b16 %v46
  %v198 = vunpack.c.h.b16 %v46
  %v199 = vunpack.c.l.b16 %v47
  %v200 = vunpack.c.h.b16 %v47
  %v201 = vunpack.c.l.b16 %v48
  %v202 = vunpack.c.h.b16 %v48
  %v203 = vunpack.c.l.b16 %v49
  %v204 = vunpack.c.h.b16 %v49
  %v205 = vunpack.c.l.b16 %v50
  %v206 = vunpack.c.h.b16 %v50
  %v207 = vunpack.c.l.b16 %v51
  %v208 = vunpack.c.h.b16 %v51
  %v209 = vunpack.c.l.b16 %v52
  %v210 = vunpack.c.h.b16 %v52
  %v211 = vunpack.c.l.b16 %v53
  %v212 = vunpack.c.h.b16 %v53
  %v213 = vunpack.c.l.b16 %v54
  %v214 = vunpack.c.h.b16 %v54
  %v215 = vunpack.c.l.b16 %v55
  %v216 = vunpack.c.h.b16 %v55
  %v217 = vunpack.c.l.b16 %v56
  %v218 = vunpack.c.h.b16 %v56
  %v219 = vunpack.c.l.b16 %v57
  %v220 = vunpack.c.h.b16 %v57
  %v221 = vunpack.c.l.b16 %v58
  %v222 = vunpack.c.h.b16 %v58
  %v223 = vunpack.c.l.b16 %v59
  %v224 = vunpack.c.h.b16 %v59
  %v225 = vunpack.c.l.b16 %v60
  %v226 = vunpack.c.h.b16 %v60
  %v227 = vunpack.c.l.b16 %v61
  %v228 = vunpack.c.h.b16 %v61
  %v229 = vunpack.c.l.b16 %v62
  %v230 = vunpack.c.h.b16 %v62
  %v231 = vunpack.c.l.b16 %v63
  %v232 = vunpack.c.h.b16 %v63
  %v233 = vunpack.c.l.b16 %v64
  %v234 = vunpack.c.h.b16 %v64
  %v235 = vunpack.c.l.b16 %v65
  %v236 = vunpack.c.h.b16 %v65
  %v237 = vunpack.c.l.b16 %v66
  %v238 = vunpack.c.h.b16 %v66
  %v239 = vpack.c.b16 %v179, %v175
  %v240 = vpack.c.b16 %v180, %v176
  %v241 = vpack.c.b16 %v181, %v177
  %v242 = vpack.c.b16 %v182, %v178
  %v243 = vpack.c.b16 %v187, %v183
  %v244 = vpack.c.b16 %v188, %v184
  %v245 = vpack.c.b16 %v189, %v185
  %v246 = vpack.c.b16 %v190, %v186
  %v247 = vpack.c.b16 %v195, %v191
  %v248 = vpack.c.b16 %v196, %v192
  %v249 = vpack.c.b16 %v197, %v193
  %v250 = vpack.c.b16 %v198, %v194
  %v251 = vpack.c.b16 %v203, %v199
  %v252 = vpack.c.b16 %v204, %v200
  %v253 = vpack.c.b16 %v205, %v201
  %v254 = vpack.c.b16 %v206, %v202
  %v255 = vpack.c.b16 %v211, %v207
  %v256 = vpack.c.b16 %v212, %v208
  %v257 = vpack.c.b16 %v213, %v209
  %v258 = vpack.c.b16 %v214, %v210
  %v259 = vpack.c.b16 %v219, %v215
  %v260 = vpack.c.b16 %v220, %v216
  %v261 = vpack.c.b16 %v221, %v217
  %v262 = vpack.c.b16 %v222, %v218
  %v263 = vpack.c.b16 %v227, %v223
  %v264 = vpack.c.b16 %v228, %v224
  %v265 = vpack.c.b16 %v229, %v225
  %v266 = vpack.c.b16 %v230, %v226
  %v267 = vpack.c.b16 %v235, %v231
  %v268 = vpack.c.b16 %v236, %v232
  %v269 = vpack.c.b16 %v237, %v233
  %v270 = vpack.c.b16 %v238, %v234
  %303 = vmatprep.subr.bf16.mxu0 %v240
  %304 = vmatpush1.bf16.msra.mxu0 %v239
  %305 = vmatprep.subr.bf16.mxu0 %v244
  %306 = vmatpush1.bf16.msra.mxu0 %v243
  %307 = vmatprep.subr.bf16.mxu0 %v248
  %308 = vmatpush1.bf16.msra.mxu0 %v247
  %309 = vmatprep.subr.bf16.mxu0 %v252
  %310 = vmatpush1.bf16.msra.mxu0 %v251
  %311 = vmatprep.subr.bf16.mxu0 %v256
  %312 = vmatpush1.bf16.msra.mxu0 %v255
  %313 = vmatprep.subr.bf16.mxu0 %v260
  %314 = vmatpush1.bf16.msra.mxu0 %v259
  %315 = vmatprep.subr.bf16.mxu0 %v264
  %316 = vmatpush1.bf16.msra.mxu0 %v263
  %317 = vmatprep.subr.bf16.mxu0 %v268
  %318 = vmatpush1.bf16.msra.mxu0 %v267
  %319 = vmatprep.subr.bf16.mxu0 0
  %320 = vmatpush1.bf16.msra.mxu0 0
  %321 = vmatprep.subr.bf16.mxu0 0
  %322 = vmatpush1.bf16.msra.mxu0 0
  %323 = vmatprep.subr.bf16.mxu0 0
  %324 = vmatpush1.bf16.msra.mxu0 0
  %325 = vmatprep.subr.bf16.mxu0 0
  %326 = vmatpush1.bf16.msra.mxu0 0
  %327 = vmatprep.subr.bf16.mxu0 0
  %328 = vmatpush1.bf16.msra.mxu0 0
  %329 = vmatprep.subr.bf16.mxu0 0
  %330 = vmatpush1.bf16.msra.mxu0 0
  %331 = vmatprep.subr.bf16.mxu0 0
  %332 = vmatpush1.bf16.msra.mxu0 0
  %333 = vmatprep.subr.bf16.mxu0 0
  %334 = vmatpush1.bf16.msra.mxu0 0
  %335 = vmatprep.mubr.bf16.mxu0 0
  %336 = vmatmul.mubr.bf16.gmra.mrb[0].mxu0 %v125
  %v337 = vpop.f32.mrb[0].mxu0
  %v338 = vadd.f32 %v72, %v337
  %v339 = vpop.f32.mrb[0].mxu0
  %v340 = vadd.f32 %v76, %v339
  %v341 = vpop.f32.mrb[0].mxu0
  %v342 = vadd.f32 %v72, %v341
  %v343 = vpop.f32.mrb[0].mxu0
  %v344 = vadd.f32 %v76, %v343
  %345 = vmatprep.mubr.bf16.mxu0 0
  %346 = vmatmul.mubr.bf16.gmra.mrb[0].mxu0 %v126
  %v347 = vpop.f32.mrb[0].mxu0
  %v348 = vadd.f32 %v72, %v347
  %v349 = vpop.f32.mrb[0].mxu0
  %v350 = vadd.f32 %v76, %v349
  %v351 = vpop.f32.mrb[0].mxu0
  %v352 = vadd.f32 %v72, %v351
  %v353 = vpop.f32.mrb[0].mxu0
  %v354 = vadd.f32 %v76, %v353
  %355 = vmatprep.mubr.bf16.mxu0 0
  %356 = vmatmul.mubr.bf16.gmra.mrb[0].mxu0 %v127
  %v357 = vpop.f32.mrb[0].mxu0
  %v358 = vadd.f32 %v72, %v357
  %v359 = vpop.f32.mrb[0].mxu0
  %v360 = vadd.f32 %v76, %v359
  %v361 = vpop.f32.mrb[0].mxu0
  %v362 = vadd.f32 %v72, %v361
  %v363 = vpop.f32.mrb[0].mxu0
  %v364 = vadd.f32 %v76, %v363
  %365 = vmatprep.mubr.bf16.mxu0 0
  %366 = vmatmul.mubr.bf16.gmra.mrb[0].mxu0 %v128
  %v367 = vpop.f32.mrb[0].mxu0
  %v368 = vadd.f32 %v72, %v367
  %v369 = vpop.f32.mrb[0].mxu0
  %v370 = vadd.f32 %v76, %v369
  %v371 = vpop.f32.mrb[0].mxu0
  %v372 = vadd.f32 %v72, %v371
  %v373 = vpop.f32.mrb[0].mxu0
  %v374 = vadd.f32 %v76, %v373
  %375 = vmatprep.mubr.bf16.mxu0 0
  %376 = vmatmul.mubr.bf16.gmra.mrb[0].mxu0 %v129
  %v377 = vpop.f32.mrb[0].mxu0
  %v378 = vadd.f32 %v72, %v377
  %v379 = vpop.f32.mrb[0].mxu0
  %v380 = vadd.f32 %v76, %v379
  %v381 = vpop.f32.mrb[0].mxu0
  %v382 = vadd.f32 %v72, %v381
  %v383 = vpop.f32.mrb[0].mxu0
  %v384 = vadd.f32 %v76, %v383
  %385 = vmatprep.mubr.bf16.mxu0 0
  %386 = vmatmul.mubr.bf16.gmra.mrb[0].mxu0 %v130
  %v387 = vpop.f32.mrb[0].mxu0
  %v388 = vadd.f32 %v72, %v387
  %v389 = vpop.f32.mrb[0].mxu0
  %v390 = vadd.f32 %v76, %v389
  %v391 = vpop.f32.mrb[0].mxu0
  %v392 = vadd.f32 %v72, %v391
  %v393 = vpop.f32.mrb[0].mxu0
  %v394 = vadd.f32 %v76, %v393
  %395 = vmatprep.mubr.bf16.mxu0 0
  %396 = vmatmul.mubr.bf16.gmra.mrb[0].mxu0 %v131
  %v397 = vpop.f32.mrb[0].mxu0
  %v398 = vadd.f32 %v72, %v397
  %v399 = vpop.f32.mrb[0].mxu0
  %v400 = vadd.f32 %v76, %v399
  %v401 = vpop.f32.mrb[0].mxu0
  %v402 = vadd.f32 %v72, %v401
  %v403 = vpop.f32.mrb[0].mxu0
  %v404 = vadd.f32 %v76, %v403
  %405 = vmatprep.mubr.bf16.mxu0 0
  %406 = vmatmul.mubr.bf16.gmra.mrb[0].mxu0 %v132
  %v407 = vpop.f32.mrb[0].mxu0
  %v408 = vadd.f32 %v72, %v407
  %v409 = vpop.f32.mrb[0].mxu0
  %v410 = vadd.f32 %v76, %v409
  %v411 = vpop.f32.mrb[0].mxu0
  %v412 = vadd.f32 %v72, %v411
  %v413 = vpop.f32.mrb[0].mxu0
  %v414 = vadd.f32 %v76, %v413
  %415 = vmatprep.mubr.bf16.mxu0 0
  %416 = vmatmul.mubr.bf16.gmra.mrb[0].mxu0 %v133
  %v417 = vpop.f32.mrb[0].mxu0
  %v418 = vadd.f32 %v72, %v417
  %v419 = vpop.f32.mrb[0].mxu0
  %v420 = vadd.f32 %v76, %v419
  %v421 = vpop.f32.mrb[0].mxu0
  %v422 = vadd.f32 %v72, %v421
  %v423 = vpop.f32.mrb[0].mxu0
  %v424 = vadd.f32 %v76, %v423
  %425 = vdwg.mxu0
  %426 = vmatprep.subr.bf16.mxu0 %v242
  %427 = vmatpush1.bf16.msra.mxu0 %v241
  %428 = vmatprep.subr.bf16.mxu0 %v246
  %429 = vmatpush1.bf16.msra.mxu0 %v245
  %430 = vmatprep.subr.bf16.mxu0 %v250
  %431 = vmatpush1.bf16.msra.mxu0 %v249
  %432 = vmatprep.subr.bf16.mxu0 %v254
  %433 = vmatpush1.bf16.msra.mxu0 %v253
  %434 = vmatprep.subr.bf16.mxu0 %v258
  %435 = vmatpush1.bf16.msra.mxu0 %v257
  %436 = vmatprep.subr.bf16.mxu0 %v262
  %437 = vmatpush1.bf16.msra.mxu0 %v261
  %438 = vmatprep.subr.bf16.mxu0 %v266
  %439 = vmatpush1.bf16.msra.mxu0 %v265
  %440 = vmatprep.subr.bf16.mxu0 %v270
  %441 = vmatpush1.bf16.msra.mxu0 %v269
  %442 = vmatprep.subr.bf16.mxu0 0
  %443 = vmatpush1.bf16.msra.mxu0 0
  %444 = vmatprep.subr.bf16.mxu0 0
  %445 = vmatpush1.bf16.msra.mxu0 0
  %446 = vmatprep.subr.bf16.mxu0 0
  %447 = vmatpush1.bf16.msra.mxu0 0
  %448 = vmatprep.subr.bf16.mxu0 0
  %449 = vmatpush1.bf16.msra.mxu0 0
  %450 = vmatprep.subr.bf16.mxu0 0
  %451 = vmatpush1.bf16.msra.mxu0 0
  %452 = vmatprep.subr.bf16.mxu0 0
  %453 = vmatpush1.bf16.msra.mxu0 0
  %454 = vmatprep.subr.bf16.mxu0 0
  %455 = vmatpush1.bf16.msra.mxu0 0
  %456 = vmatprep.subr.bf16.mxu0 0
  %457 = vmatpush1.bf16.msra.mxu0 0
  %458 = vmatprep.mubr.bf16.mxu0 0
  %459 = vmatmul.mubr.bf16.gmra.mrb[0].mxu0 %v125
  %v460 = vpop.f32.mrb[0].mxu0
  %v461 = vadd.f32 %v80, %v460
  %v462 = vpop.f32.mrb[0].mxu0
  %v463 = vadd.f32 %v84, %v462
  %v464 = vpop.f32.mrb[0].mxu0
  %v465 = vadd.f32 %v80, %v464
  %v466 = vpop.f32.mrb[0].mxu0
  %v467 = vadd.f32 %v84, %v466
  %468 = vmatprep.mubr.bf16.mxu0 0
  %469 = vmatmul.mubr.bf16.gmra.mrb[0].mxu0 %v126
  %v470 = vpop.f32.mrb[0].mxu0
  %v471 = vadd.f32 %v80, %v470
  %v472 = vpop.f32.mrb[0].mxu0
  %v473 = vadd.f32 %v84, %v472
  %v474 = vpop.f32.mrb[0].mxu0
  %v475 = vadd.f32 %v80, %v474
  %v476 = vpop.f32.mrb[0].mxu0
  %v477 = vadd.f32 %v84, %v476
  %478 = vmatprep.mubr.bf16.mxu0 0
  %479 = vmatmul.mubr.bf16.gmra.mrb[0].mxu0 %v127
  %v480 = vpop.f32.mrb[0].mxu0
  %v481 = vadd.f32 %v80, %v480
  %v482 = vpop.f32.mrb[0].mxu0
  %v483 = vadd.f32 %v84, %v482
  %v484 = vpop.f32.mrb[0].mxu0
  %v485 = vadd.f32 %v80, %v484
  %v486 = vpop.f32.mrb[0].mxu0
  %v487 = vadd.f32 %v84, %v486
  %488 = vmatprep.mubr.bf16.mxu0 0
  %489 = vmatmul.mubr.bf16.gmra.mrb[0].mxu0 %v128
  %v490 = vpop.f32.mrb[0].mxu0
  %v491 = vadd.f32 %v80, %v490
  %v492 = vpop.f32.mrb[0].mxu0
  %v493 = vadd.f32 %v84, %v492
  %v494 = vpop.f32.mrb[0].mxu0
  %v495 = vadd.f32 %v80, %v494
  %v496 = vpop.f32.mrb[0].mxu0
  %v497 = vadd.f32 %v84, %v496
  %498 = vmatprep.mubr.bf16.mxu0 0
  %499 = vmatmul.mubr.bf16.gmra.mrb[0].mxu0 %v129
  %v500 = vpop.f32.mrb[0].mxu0
  %v501 = vadd.f32 %v80, %v500
  %v502 = vpop.f32.mrb[0].mxu0
  %v503 = vadd.f32 %v84, %v502
  %v504 = vpop.f32.mrb[0].mxu0
  %v505 = vadd.f32 %v80, %v504
  %v506 = vpop.f32.mrb[0].mxu0
  %v507 = vadd.f32 %v84, %v506
  %508 = vmatprep.mubr.bf16.mxu0 0
  %509 = vmatmul.mubr.bf16.gmra.mrb[0].mxu0 %v130
  %v510 = vpop.f32.mrb[0].mxu0
  %v511 = vadd.f32 %v80, %v510
  %v512 = vpop.f32.mrb[0].mxu0
  %v513 = vadd.f32 %v84, %v512
  %v514 = vpop.f32.mrb[0].mxu0
  %v515 = vadd.f32 %v80, %v514
  %v516 = vpop.f32.mrb[0].mxu0
  %v517 = vadd.f32 %v84, %v516
  %518 = vmatprep.mubr.bf16.mxu0 0
  %519 = vmatmul.mubr.bf16.gmra.mrb[0].mxu0 %v131
  %v520 = vpop.f32.mrb[0].mxu0
  %v521 = vadd.f32 %v80, %v520
  %v522 = vpop.f32.mrb[0].mxu0
  %v523 = vadd.f32 %v84, %v522
  %v524 = vpop.f32.mrb[0].mxu0
  %v525 = vadd.f32 %v80, %v524
  %v526 = vpop.f32.mrb[0].mxu0
  %v527 = vadd.f32 %v84, %v526
  %528 = vmatprep.mubr.bf16.mxu0 0
  %529 = vmatmul.mubr.bf16.gmra.mrb[0].mxu0 %v132
  %v530 = vpop.f32.mrb[0].mxu0
  %v531 = vadd.f32 %v80, %v530
  %v532 = vpop.f32.mrb[0].mxu0
  %v533 = vadd.f32 %v84, %v532
  %v534 = vpop.f32.mrb[0].mxu0
  %v535 = vadd.f32 %v80, %v534
  %v536 = vpop.f32.mrb[0].mxu0
  %v537 = vadd.f32 %v84, %v536
  %538 = vmatprep.mubr.bf16.mxu0 0
  %539 = vmatmul.mubr.bf16.gmra.mrb[0].mxu0 %v133
  %v540 = vpop.f32.mrb[0].mxu0
  %v541 = vadd.f32 %v80, %v540
  %v542 = vpop.f32.mrb[0].mxu0
  %v543 = vadd.f32 %v84, %v542
  %v544 = vpop.f32.mrb[0].mxu0
  %v545 = vadd.f32 %v80, %v544
  %v546 = vpop.f32.mrb[0].mxu0
  %v547 = vadd.f32 %v84, %v546
  %548 = vdwg.mxu0
  %v549 = vmax.f32 %v338, 0.0
  %v550 = vmax.f32 %v340, 0.0
  %v551 = vmax.f32 %v461, 0.0
  %v552 = vmax.f32 %v463, 0.0
  %v553 = vmax.f32 %v342, 0.0
  %v554 = vmax.f32 %v344, 0.0
  %v555 = vmax.f32 %v465, 0.0
  %v556 = vmax.f32 %v467, 0.0
  %v557 = vmax.f32 %v348, 0.0
  %v558 = vmax.f32 %v350, 0.0
  %v559 = vmax.f32 %v471, 0.0
  %v560 = vmax.f32 %v473, 0.0
  %v561 = vmax.f32 %v352, 0.0
  %v562 = vmax.f32 %v354, 0.0
  %v563 = vmax.f32 %v475, 0.0
  %v564 = vmax.f32 %v477, 0.0
  %v565 = vmax.f32 %v358, 0.0
  %v566 = vmax.f32 %v360, 0.0
  %v567 = vmax.f32 %v481, 0.0
  %v568 = vmax.f32 %v483, 0.0
  %v569 = vmax.f32 %v362, 0.0
  %v570 = vmax.f32 %v364, 0.0
  %v571 = vmax.f32 %v485, 0.0
  %v572 = vmax.f32 %v487, 0.0
  %v573 = vmax.f32 %v368, 0.0
  %v574 = vmax.f32 %v370, 0.0
  %v575 = vmax.f32 %v491, 0.0
  %v576 = vmax.f32 %v493, 0.0
  %v577 = vmax.f32 %v372, 0.0
  %v578 = vmax.f32 %v374, 0.0
  %v579 = vmax.f32 %v495, 0.0
  %v580 = vmax.f32 %v497, 0.0
  %v581 = vmax.f32 %v378, 0.0
  %v582 = vmax.f32 %v380, 0.0
  %v583 = vmax.f32 %v501, 0.0
  %v584 = vmax.f32 %v503, 0.0
  %v585 = vmax.f32 %v382, 0.0
  %v586 = vmax.f32 %v384, 0.0
  %v587 = vmax.f32 %v505, 0.0
  %v588 = vmax.f32 %v507, 0.0
  %v589 = vmax.f32 %v388, 0.0
  %v590 = vmax.f32 %v390, 0.0
  %v591 = vmax.f32 %v511, 0.0
  %v592 = vmax.f32 %v513, 0.0
  %v593 = vmax.f32 %v392, 0.0
  %v594 = vmax.f32 %v394, 0.0
  %v595 = vmax.f32 %v515, 0.0
  %v596 = vmax.f32 %v517, 0.0
  %v597 = vmax.f32 %v398, 0.0
  %v598 = vmax.f32 %v400, 0.0
  %v599 = vmax.f32 %v521, 0.0
  %v600 = vmax.f32 %v523, 0.0
  %v601 = vmax.f32 %v402, 0.0
  %v602 = vmax.f32 %v404, 0.0
  %v603 = vmax.f32 %v525, 0.0
  %v604 = vmax.f32 %v527, 0.0
  %v605 = vmax.f32 %v408, 0.0
  %v606 = vmax.f32 %v410, 0.0
  %v607 = vmax.f32 %v531, 0.0
  %v608 = vmax.f32 %v533, 0.0
  %v609 = vmax.f32 %v412, 0.0
  %v610 = vmax.f32 %v414, 0.0
  %v611 = vmax.f32 %v535, 0.0
  %v612 = vmax.f32 %v537, 0.0
  %v613 = vmax.f32 %v418, 0.0
  %v614 = vmax.f32 %v420, 0.0
  %v615 = vmax.f32 %v541, 0.0
  %v616 = vmax.f32 %v543, 0.0
  %v617 = vmax.f32 %v422, 0.0
  %v618 = vmax.f32 %v424, 0.0
  %v619 = vmax.f32 %v545, 0.0
  %v620 = vmax.f32 %v547, 0.0
  %621 = vst [vmem:[%s3] sm:$0xff] %v549
  %622 = vst [vmem:[%s3 + $0x8] sm:$0xff] %v550
  %623 = vst [vmem:[%s3 + $0x10] sm:$0xff] %v551
  %624 = vst [vmem:[%s3 + $0x18] sm:$0xff] %v552
  %625 = vst [vmem:[%s3 + $0x20] sm:$0xff] %v553
  %626 = vst [vmem:[%s3 + $0x28] sm:$0xff] %v554
  %627 = vst [vmem:[%s3 + $0x30] sm:$0xff] %v555
  %628 = vst [vmem:[%s3 + $0x38] sm:$0xff] %v556
  %629 = vst [vmem:[%s3 + $0x40] sm:$0xff] %v557
  %630 = vst [vmem:[%s3 + $0x48] sm:$0xff] %v558
  %631 = vst [vmem:[%s3 + $0x50] sm:$0xff] %v559
  %632 = vst [vmem:[%s3 + $0x58] sm:$0xff] %v560
  %633 = vst [vmem:[%s3 + $0x60] sm:$0xff] %v561
  %634 = vst [vmem:[%s3 + $0x68] sm:$0xff] %v562
  %635 = vst [vmem:[%s3 + $0x70] sm:$0xff] %v563
  %636 = vst [vmem:[%s3 + $0x78] sm:$0xff] %v564
  %637 = vst [vmem:[%s3 + $0x80] sm:$0xff] %v565
  %638 = vst [vmem:[%s3 + $0x88] sm:$0xff] %v566
  %639 = vst [vmem:[%s3 + $0x90] sm:$0xff] %v567
  %640 = vst [vmem:[%s3 + $0x98] sm:$0xff] %v568
  %641 = vst [vmem:[%s3 + $0xa0] sm:$0xff] %v569
  %642 = vst [vmem:[%s3 + $0xa8] sm:$0xff] %v570
  %643 = vst [vmem:[%s3 + $0xb0] sm:$0xff] %v571
  %644 = vst [vmem:[%s3 + $0xb8] sm:$0xff] %v572
  %645 = vst [vmem:[%s3 + $0xc0] sm:$0xff] %v573
  %646 = vst [vmem:[%s3 + $0xc8] sm:$0xff] %v574
  %647 = vst [vmem:[%s3 + $0xd0] sm:$0xff] %v575
  %648 = vst [vmem:[%s3 + $0xd8] sm:$0xff] %v576
  %649 = vst [vmem:[%s3 + $0xe0] sm:$0xff] %v577
  %650 = vst [vmem:[%s3 + $0xe8] sm:$0xff] %v578
  %651 = vst [vmem:[%s3 + $0xf0] sm:$0xff] %v579
  %652 = vst [vmem:[%s3 + $0xf8] sm:$0xff] %v580
  %653 = vst [vmem:[%s3 + $0x100] sm:$0xff] %v581
  %654 = vst [vmem:[%s3 + $0x108] sm:$0xff] %v582
  %655 = vst [vmem:[%s3 + $0x110] sm:$0xff] %v583
  %656 = vst [vmem:[%s3 + $0x118] sm:$0xff] %v584
  %657 = vst [vmem:[%s3 + $0x120] sm:$0xff] %v585
  %658 = vst [vmem:[%s3 + $0x128] sm:$0xff] %v586
  %659 = vst [vmem:[%s3 + $0x130] sm:$0xff] %v587
  %660 = vst [vmem:[%s3 + $0x138] sm:$0xff] %v588
  %661 = vst [vmem:[%s3 + $0x140] sm:$0xff] %v589
  %662 = vst [vmem:[%s3 + $0x148] sm:$0xff] %v590
  %663 = vst [vmem:[%s3 + $0x150] sm:$0xff] %v591
  %664 = vst [vmem:[%s3 + $0x158] sm:$0xff] %v592
  %665 = vst [vmem:[%s3 + $0x160] sm:$0xff] %v593
  %666 = vst [vmem:[%s3 + $0x168] sm:$0xff] %v594
  %667 = vst [vmem:[%s3 + $0x170] sm:$0xff] %v595
  %668 = vst [vmem:[%s3 + $0x178] sm:$0xff] %v596
  %669 = vst [vmem:[%s3 + $0x180] sm:$0xff] %v597
  %670 = vst [vmem:[%s3 + $0x188] sm:$0xff] %v598
  %671 = vst [vmem:[%s3 + $0x190] sm:$0xff] %v599
  %672 = vst [vmem:[%s3 + $0x198] sm:$0xff] %v600
  %673 = vst [vmem:[%s3 + $0x1a0] sm:$0xff] %v601
  %674 = vst [vmem:[%s3 + $0x1a8] sm:$0xff] %v602
  %675 = vst [vmem:[%s3 + $0x1b0] sm:$0xff] %v603
  %676 = vst [vmem:[%s3 + $0x1b8] sm:$0xff] %v604
  %677 = vst [vmem:[%s3 + $0x1c0] sm:$0xff] %v605
  %678 = vst [vmem:[%s3 + $0x1c8] sm:$0xff] %v606
  %679 = vst [vmem:[%s3 + $0x1d0] sm:$0xff] %v607
  %680 = vst [vmem:[%s3 + $0x1d8] sm:$0xff] %v608
  %681 = vst [vmem:[%s3 + $0x1e0] sm:$0xff] %v609
  %682 = vst [vmem:[%s3 + $0x1e8] sm:$0xff] %v610
  %683 = vst [vmem:[%s3 + $0x1f0] sm:$0xff] %v611
  %684 = vst [vmem:[%s3 + $0x1f8] sm:$0xff] %v612
  %685 = vst [vmem:[%s3 + $0x200] sm:$0xff] %v613
  %686 = vst [vmem:[%s3 + $0x208] sm:$0xff] %v614
  %687 = vst [vmem:[%s3 + $0x210] sm:$0xff] %v615
  %688 = vst [vmem:[%s3 + $0x218] sm:$0xff] %v616
  %689 = vst [vmem:[%s3 + $0x220] sm:$0xff] %v617
  %690 = vst [vmem:[%s3 + $0x228] sm:$0xff] %v618
  %691 = vst [vmem:[%s3 + $0x230] sm:$0xff] %v619
  %692 = vst [vmem:[%s3 + $0x238] sm:$0xff] %v620
  %v693 = vmax.f32 %v549, %v550
  %v694 = vmax.f32 %v553, %v554
  %v695 = vmax.f32 %v557, %v558
  %v696 = vmax.f32 %v561, %v562
  %v697 = vmax.f32 %v565, %v566
  %v698 = vmax.f32 %v569, %v570
  %v699 = vmax.f32 %v573, %v574
  %v700 = vmax.f32 %v577, %v578
  %v701 = vmax.f32 %v581, %v582
  %v702 = vmax.f32 %v585, %v586
  %v703 = vmax.f32 %v589, %v590
  %v704 = vmax.f32 %v593, %v594
  %v705 = vmax.f32 %v597, %v598
  %v706 = vmax.f32 %v601, %v602
  %v707 = vmax.f32 %v605, %v606
  %v708 = vmax.f32 %v609, %v610
  %v709 = vmax.f32 %v613, %v614
  %v710 = vmax.f32 %v617, %v618
  %v711 = vmax.f32 %v551, %v552
  %v712 = vmax.f32 %v555, %v556
  %v713 = vmax.f32 %v559, %v560
  %v714 = vmax.f32 %v563, %v564
  %v715 = vmax.f32 %v567, %v568
  %v716 = vmax.f32 %v571, %v572
  %v717 = vmax.f32 %v575, %v576
  %v718 = vmax.f32 %v579, %v580
  %v719 = vmax.f32 %v583, %v584
  %v720 = vmax.f32 %v587, %v588
  %v721 = vmax.f32 %v591, %v592
  %v722 = vmax.f32 %v595, %v596
  %v723 = vmax.f32 %v599, %v600
  %v724 = vmax.f32 %v603, %v604
  %v725 = vmax.f32 %v607, %v608
  %v726 = vmax.f32 %v611, %v612
  %v727 = vmax.f32 %v615, %v616
  %v728 = vmax.f32 %v619, %v620
  %v729 = vmax.f32 %v693, %v711
  %v730 = vmax.f32 %v694, %v712
  %v731 = vmax.f32 %v695, %v713
  %v732 = vmax.f32 %v696, %v714
  %v733 = vmax.f32 %v697, %v715
  %v734 = vmax.f32 %v698, %v716
  %v735 = vmax.f32 %v699, %v717
  %v736 = vmax.f32 %v700, %v718
  %v737 = vmax.f32 %v701, %v719
  %v738 = vmax.f32 %v702, %v720
  %v739 = vmax.f32 %v703, %v721
  %v740 = vmax.f32 %v704, %v722
  %v741 = vmax.f32 %v705, %v723
  %v742 = vmax.f32 %v706, %v724
  %v743 = vmax.f32 %v707, %v725
  %v744 = vmax.f32 %v708, %v726
  %v745 = vmax.f32 %v709, %v727
  %v746 = vmax.f32 %v710, %v728
  %v747 = vpack.c.bf16 %v730, %v729
  %v748 = vpack.c.bf16 %v732, %v731
  %v749 = vpack.c.bf16 %v734, %v733
  %v750 = vpack.c.bf16 %v736, %v735
  %v751 = vpack.c.bf16 %v738, %v737
  %v752 = vpack.c.bf16 %v740, %v739
  %v753 = vpack.c.bf16 %v742, %v741
  %v754 = vpack.c.bf16 %v744, %v743
  %v755 = vpack.c.bf16 %v746, %v745
  %v765 = vunpack.c.l.b16 %v747
  %v766 = vunpack.c.h.b16 %v747
  %v767 = vunpack.c.l.b16 %v748
  %v768 = vunpack.c.h.b16 %v748
  %v769 = vunpack.c.l.b16 %v749
  %v770 = vunpack.c.h.b16 %v749
  %v771 = vunpack.c.l.b16 %v750
  %v772 = vunpack.c.h.b16 %v750
  %v773 = vunpack.c.l.b16 %v751
  %v774 = vunpack.c.h.b16 %v751
  %v775 = vunpack.c.l.b16 %v752
  %v776 = vunpack.c.h.b16 %v752
  %v777 = vunpack.c.l.b16 %v753
  %v778 = vunpack.c.h.b16 %v753
  %v779 = vunpack.c.l.b16 %v754
  %v780 = vunpack.c.h.b16 %v754
  %v781 = vunpack.c.l.b16 %v755
  %v782 = vunpack.c.h.b16 %v755
  %v783 = vpack.c.b16 %v765, %v765
  %v784 = vpack.c.b16 %v766, %v766
  %v785 = vpack.c.b16 %v767, %v767
  %v786 = vpack.c.b16 %v768, %v768
  %v787 = vpack.c.b16 %v769, %v769
  %v788 = vpack.c.b16 %v770, %v770
  %v789 = vpack.c.b16 %v771, %v771
  %v790 = vpack.c.b16 %v772, %v772
  %v791 = vpack.c.b16 %v773, %v773
  %v792 = vpack.c.b16 %v774, %v774
  %v793 = vpack.c.b16 %v775, %v775
  %v794 = vpack.c.b16 %v776, %v776
  %v795 = vpack.c.b16 %v777, %v777
  %v796 = vpack.c.b16 %v778, %v778
  %v797 = vpack.c.b16 %v779, %v779
  %v798 = vpack.c.b16 %v780, %v780
  %v799 = vpack.c.b16 %v781, %v781
  %v800 = vpack.c.b16 %v782, %v782
  %819 = vst [vmem:[%s4] sm:$0xf] %v783
  %820 = vst [vmem:[%s4 + $0x4] sm:$0xf] %v784
  %821 = vst [vmem:[%s4 + $0x8] sm:$0xf] %v785
  %822 = vst [vmem:[%s4 + $0xc] sm:$0xf] %v786
  %823 = vst [vmem:[%s4 + $0x10] sm:$0xf] %v787
  %824 = vst [vmem:[%s4 + $0x14] sm:$0xf] %v788
  %825 = vst [vmem:[%s4 + $0x18] sm:$0xf] %v789
  %826 = vst [vmem:[%s4 + $0x1c] sm:$0xf] %v790
  %827 = vst [vmem:[%s4 + $0x20] sm:$0xf] %v791
  %828 = vst [vmem:[%s4 + $0x24] sm:$0xf] %v792
  %829 = vst [vmem:[%s4 + $0x28] sm:$0xf] %v793
  %830 = vst [vmem:[%s4 + $0x2c] sm:$0xf] %v794
  %831 = vst [vmem:[%s4 + $0x30] sm:$0xf] %v795
  %832 = vst [vmem:[%s4 + $0x34] sm:$0xf] %v796
  %833 = vst [vmem:[%s4 + $0x38] sm:$0xf] %v797
  %834 = vst [vmem:[%s4 + $0x3c] sm:$0xf] %v798
  %835 = vst [vmem:[%s4 + $0x40] sm:$0xf] %v799
  %836 = vst [vmem:[%s4 + $0x44] sm:$0xf] %v800
  // Predicated region
  $region14: #{incremental_net_forward.2} parent=0 // pred_check
    _
  $region15: #{incremental_net_forward.2} parent=0 // pred_check_branch
    %838 = sbr.rel (0) target = $region17
  $region16: #{incremental_net_forward.2} parent=0 // pred_region
    _
  $region17: #{incremental_net_forward.2} parent=0 // pred_fallthru
    _
  // Predicated region
  $region18: #{incremental_net_forward.2} parent=0 // pred_check
    _
  $region19: #{incremental_net_forward.2} parent=0 // pred_check_branch
    %840 = sbr.rel (0) target = $region21
  $region20: #{incremental_net_forward.2} parent=0 // pred_region
    _
  $region21: #{incremental_net_forward.2} parent=0 // pred_fallthru
    _
  // Predicated region
  $region22: #{incremental_net_forward.2} parent=0 // pred_check
    _
  $region23: #{incremental_net_forward.2} parent=0 // pred_check_branch
    %842 = sbr.rel (0) target = $region25
  $region24: #{incremental_net_forward.2} parent=0 // pred_region
    _
  $region25: #{incremental_net_forward.2} parent=0 // pred_fallthru
    _
  // Predicated region
  $region26: #{incremental_net_forward.2} parent=0 // pred_check
    _
  $region27: #{incremental_net_forward.2} parent=0 // pred_check_branch
    %844 = sbr.rel (0) target = $region29
  $region28: #{incremental_net_forward.2} parent=0 // pred_region
    _
  $region29: #{incremental_net_forward.2} parent=0 // pred_fallthru
    _

// kernel: incremental_net_forward.3
$region0: #{incremental_net_forward.3}
  #allocation0 [shape = 'u32[]', space=smem, size = 0x4, offset = 0x4, fixed_abs, tag = 'smem constant byte address 0x4 - core index']
  #allocation1 [shape = 'u32[144,128]{1,0:T(1,128)}', space=vmem, size = 0x12000, scoped, tag = 'internal scratch']
  %s0 = inlined_call_operand.vmem [shape: bf16[48,512], index: 0, kind: input, shape index: {}]
  %s1 = inlined_call_operand.vmem [shape: bf16[512,512], index: 1, kind: input, shape index: {}]
  %s2 = inlined_call_operand.vmem [shape: f32[1,512], index: 2, kind: input, shape index: {}]
  %s3 = inlined_call_operand.vmem [shape: f32[2,48], index: 3, kind: input, shape index: {}]
  %s4 = inlined_call_operand.vmem [shape: f32[128,128], index: 4, kind: input, shape index: {}]
  %s5 = inlined_call_operand.vmem [shape: f32[1,128], index: 5, kind: input, shape index: {}]
  %s6 = inlined_call_operand.vmem [shape: f32[1,48,512], index: 6, kind: output, shape index: {0}]
  %s7 = inlined_call_operand.hbm [shape: f32[1,2,128], index: 7, kind: output, shape index: {1}]
  %s8 = inlined_call_operand.hbm [shape: f32[1,2,128], index: 8, kind: output, shape index: {2}]
  %9 = xla_tuple %s6, %s7, %s8
  %s10 = sld [smem:[#allocation0]]
  $region50: #{incremental_net_forward.3} parent=0
    _
  %s12 = ssub.s32 1, %s10
  %s13 = scalar_select 0, %s12, %s10
  $region1: #{incremental_net_forward.3} parent=0
    #allocation2 [shape = 'u8[1024]{0}', space=vmem, size = 0x400, scoped, tag = 'output window, operand 1, single buffered']
    #allocation3 [shape = 's32[1]{0}', space=sflag, size = 0x4, scoped, tag = 'scoped memory for incremental_net_forward.3']
    #allocation4 [shape = 'u8[1024]{0}', space=vmem, size = 0x400, scoped, tag = 'output window, operand 2, single buffered']
    #allocation5 [shape = 's32[1]{0}', space=sflag, size = 0x4, scoped, tag = 'scoped memory for incremental_net_forward.3']
    %14 = vsyncpa [#allocation3], 0
    %15 = vsyncpa [#allocation5], 0
    // Predicated region
    $region2: #{incremental_net_forward.3} parent=1 // pred_check
      _
    $region3: #{incremental_net_forward.3} parent=1 // pred_check_branch
      %17 = sbr.rel (0) target = $region5
    $region4: #{incremental_net_forward.3} parent=1 // pred_region
      _
    $region5: #{incremental_net_forward.3} parent=1 // pred_fallthru
      _
    // Predicated region
    $region6: #{incremental_net_forward.3} parent=1 // pred_check
      _
    $region7: #{incremental_net_forward.3} parent=1 // pred_check_branch
      %19 = sbr.rel (0) target = $region9
    $region8: #{incremental_net_forward.3} parent=1 // pred_region
      _
    $region9: #{incremental_net_forward.3} parent=1 // pred_fallthru
      _
    // Predicated region
    $region10: #{incremental_net_forward.3} parent=1 // pred_check
      _
    $region11: #{incremental_net_forward.3} parent=1 // pred_check_branch
      %21 = sbr.rel (0) target = $region13
    $region12: #{incremental_net_forward.3} parent=1 // pred_region
      _
    $region13: #{incremental_net_forward.3} parent=1 // pred_fallthru
      _
    // Predicated region
    $region14: #{incremental_net_forward.3} parent=1 // pred_check
      _
    $region15: #{incremental_net_forward.3} parent=1 // pred_check_branch
      %23 = sbr.rel (0) target = $region17
    $region16: #{incremental_net_forward.3} parent=1 // pred_region
      _
    $region17: #{incremental_net_forward.3} parent=1 // pred_fallthru
      _
    // Predicated region
    $region18: #{incremental_net_forward.3} parent=1 // pred_check
      _
    $region19: #{incremental_net_forward.3} parent=1 // pred_check_branch
      %25 = sbr.rel (0) target = $region21
    $region20: #{incremental_net_forward.3} parent=1 // pred_region
      _
    $region21: #{incremental_net_forward.3} parent=1 // pred_fallthru
      _
    // Predicated region
    $region22: #{incremental_net_forward.3} parent=1 // pred_check
      _
    $region23: #{incremental_net_forward.3} parent=1 // pred_check_branch
      %27 = sbr.rel (0) target = $region25
    $region24: #{incremental_net_forward.3} parent=1 // pred_region
      _
    $region25: #{incremental_net_forward.3} parent=1 // pred_fallthru
      _
    %v28 = vld [vmem:[%s0] sm:$0xff]
    %v29 = vld [vmem:[%s0 + $0x8] sm:$0xff]
    %v30 = vld [vmem:[%s0 + $0x10] sm:$0xff]
    %v31 = vld [vmem:[%s0 + $0x18] sm:$0xff]
    %v32 = vld [vmem:[%s0 + $0x20] sm:$0xff]
    %v33 = vld [vmem:[%s0 + $0x28] sm:$0xff]
    %v34 = vld [vmem:[%s0 + $0x30] sm:$0xff]
    %v35 = vld [vmem:[%s0 + $0x38] sm:$0xff]
    %v36 = vld [vmem:[%s0 + $0x40] sm:$0xff]
    %v37 = vld [vmem:[%s0 + $0x48] sm:$0xff]
    %v38 = vld [vmem:[%s0 + $0x50] sm:$0xff]
    %v39 = vld [vmem:[%s0 + $0x58] sm:$0xff]
    %v40 = vld [vmem:[%s1] sm:$0xff]
    %v41 = vld [vmem:[%s1 + $0x8] sm:$0xff]
    %v42 = vld [vmem:[%s1 + $0x10] sm:$0xff]
    %v43 = vld [vmem:[%s1 + $0x18] sm:$0xff]
    %v44 = vld [vmem:[%s1 + $0x20] sm:$0xff]
    %v45 = vld [vmem:[%s1 + $0x28] sm:$0xff]
    %v46 = vld [vmem:[%s1 + $0x30] sm:$0xff]
    %v47 = vld [vmem:[%s1 + $0x38] sm:$0xff]
    %v48 = vld [vmem:[%s1 + $0x40] sm:$0xff]
    %v49 = vld [vmem:[%s1 + $0x48] sm:$0xff]
    %v50 = vld [vmem:[%s1 + $0x50] sm:$0xff]
    %v51 = vld [vmem:[%s1 + $0x58] sm:$0xff]
    %v52 = vld [vmem:[%s1 + $0x60] sm:$0xff]
    %v53 = vld [vmem:[%s1 + $0x68] sm:$0xff]
    %v54 = vld [vmem:[%s1 + $0x70] sm:$0xff]
    %v55 = vld [vmem:[%s1 + $0x78] sm:$0xff]
    %v56 = vld [vmem:[%s1 + $0x80] sm:$0xff]
    %v57 = vld [vmem:[%s1 + $0x88] sm:$0xff]
    %v58 = vld [vmem:[%s1 + $0x90] sm:$0xff]
    %v59 = vld [vmem:[%s1 + $0x98] sm:$0xff]
    %v60 = vld [vmem:[%s1 + $0xa0] sm:$0xff]
    %v61 = vld [vmem:[%s1 + $0xa8] sm:$0xff]
    %v62 = vld [vmem:[%s1 + $0xb0] sm:$0xff]
    %v63 = vld [vmem:[%s1 + $0xb8] sm:$0xff]
    %v64 = vld [vmem:[%s1 + $0xc0] sm:$0xff]
    %v65 = vld [vmem:[%s1 + $0xc8] sm:$0xff]
    %v66 = vld [vmem:[%s1 + $0xd0] sm:$0xff]
    %v67 = vld [vmem:[%s1 + $0xd8] sm:$0xff]
    %v68 = vld [vmem:[%s1 + $0xe0] sm:$0xff]
    %v69 = vld [vmem:[%s1 + $0xe8] sm:$0xff]
    %v70 = vld [vmem:[%s1 + $0xf0] sm:$0xff]
    %v71 = vld [vmem:[%s1 + $0xf8] sm:$0xff]
    %v72 = vld [vmem:[%s1 + $0x100] sm:$0xff]
    %v73 = vld [vmem:[%s1 + $0x108] sm:$0xff]
    %v74 = vld [vmem:[%s1 + $0x110] sm:$0xff]
    %v75 = vld [vmem:[%s1 + $0x118] sm:$0xff]
    %v76 = vld [vmem:[%s1 + $0x120] sm:$0xff]
    %v77 = vld [vmem:[%s1 + $0x128] sm:$0xff]
    %v78 = vld [vmem:[%s1 + $0x130] sm:$0xff]
    %v79 = vld [vmem:[%s1 + $0x138] sm:$0xff]
    %v80 = vld [vmem:[%s1 + $0x140] sm:$0xff]
    %v81 = vld [vmem:[%s1 + $0x148] sm:$0xff]
    %v82 = vld [vmem:[%s1 + $0x150] sm:$0xff]
    %v83 = vld [vmem:[%s1 + $0x158] sm:$0xff]
    %v84 = vld [vmem:[%s1 + $0x160] sm:$0xff]
    %v85 = vld [vmem:[%s1 + $0x168] sm:$0xff]
    %v86 = vld [vmem:[%s1 + $0x170] sm:$0xff]
    %v87 = vld [vmem:[%s1 + $0x178] sm:$0xff]
    %v88 = vld [vmem:[%s1 + $0x180] sm:$0xff]
    %v89 = vld [vmem:[%s1 + $0x188] sm:$0xff]
    %v90 = vld [vmem:[%s1 + $0x190] sm:$0xff]
    %v91 = vld [vmem:[%s1 + $0x198] sm:$0xff]
    %v92 = vld [vmem:[%s1 + $0x1a0] sm:$0xff]
    %v93 = vld [vmem:[%s1 + $0x1a8] sm:$0xff]
    %v94 = vld [vmem:[%s1 + $0x1b0] sm:$0xff]
    %v95 = vld [vmem:[%s1 + $0x1b8] sm:$0xff]
    %v96 = vld [vmem:[%s1 + $0x1c0] sm:$0xff]
    %v97 = vld [vmem:[%s1 + $0x1c8] sm:$0xff]
    %v98 = vld [vmem:[%s1 + $0x1d0] sm:$0xff]
    %v99 = vld [vmem:[%s1 + $0x1d8] sm:$0xff]
    %v100 = vld [vmem:[%s1 + $0x1e0] sm:$0xff]
    %v101 = vld [vmem:[%s1 + $0x1e8] sm:$0xff]
    %v102 = vld [vmem:[%s1 + $0x1f0] sm:$0xff]
    %v103 = vld [vmem:[%s1 + $0x1f8] sm:$0xff]
    %v104 = vld [vmem:[%s1 + $0x200] sm:$0xff]
    %v105 = vld [vmem:[%s1 + $0x208] sm:$0xff]
    %v106 = vld [vmem:[%s1 + $0x210] sm:$0xff]
    %v107 = vld [vmem:[%s1 + $0x218] sm:$0xff]
    %v108 = vld [vmem:[%s1 + $0x220] sm:$0xff]
    %v109 = vld [vmem:[%s1 + $0x228] sm:$0xff]
    %v110 = vld [vmem:[%s1 + $0x230] sm:$0xff]
    %v111 = vld [vmem:[%s1 + $0x238] sm:$0xff]
    %v112 = vld [vmem:[%s1 + $0x240] sm:$0xff]
    %v113 = vld [vmem:[%s1 + $0x248] sm:$0xff]
    %v114 = vld [vmem:[%s1 + $0x250] sm:$0xff]
    %v115 = vld [vmem:[%s1 + $0x258] sm:$0xff]
    %v116 = vld [vmem:[%s1 + $0x260] sm:$0xff]
    %v117 = vld [vmem:[%s1 + $0x268] sm:$0xff]
    %v118 = vld [vmem:[%s1 + $0x270] sm:$0xff]
    %v119 = vld [vmem:[%s1 + $0x278] sm:$0xff]
    %v120 = vld [vmem:[%s1 + $0x280] sm:$0xff]
    %v121 = vld [vmem:[%s1 + $0x288] sm:$0xff]
    %v122 = vld [vmem:[%s1 + $0x290] sm:$0xff]
    %v123 = vld [vmem:[%s1 + $0x298] sm:$0xff]
    %v124 = vld [vmem:[%s1 + $0x2a0] sm:$0xff]
    %v125 = vld [vmem:[%s1 + $0x2a8] sm:$0xff]
    %v126 = vld [vmem:[%s1 + $0x2b0] sm:$0xff]
    %v127 = vld [vmem:[%s1 + $0x2b8] sm:$0xff]
    %v128 = vld [vmem:[%s1 + $0x2c0] sm:$0xff]
    %v129 = vld [vmem:[%s1 + $0x2c8] sm:$0xff]
    %v130 = vld [vmem:[%s1 + $0x2d0] sm:$0xff]
    %v131 = vld [vmem:[%s1 + $0x2d8] sm:$0xff]
    %v132 = vld [vmem:[%s1 + $0x2e0] sm:$0xff]
    %v133 = vld [vmem:[%s1 + $0x2e8] sm:$0xff]
    %v134 = vld [vmem:[%s1 + $0x2f0] sm:$0xff]
    %v135 = vld [vmem:[%s1 + $0x2f8] sm:$0xff]
    %v136 = vld [vmem:[%s1 + $0x300] sm:$0xff]
    %v137 = vld [vmem:[%s1 + $0x308] sm:$0xff]
    %v138 = vld [vmem:[%s1 + $0x310] sm:$0xff]
    %v139 = vld [vmem:[%s1 + $0x318] sm:$0xff]
    %v140 = vld [vmem:[%s1 + $0x320] sm:$0xff]
    %v141 = vld [vmem:[%s1 + $0x328] sm:$0xff]
    %v142 = vld [vmem:[%s1 + $0x330] sm:$0xff]
    %v143 = vld [vmem:[%s1 + $0x338] sm:$0xff]
    %v144 = vld [vmem:[%s1 + $0x340] sm:$0xff]
    %v145 = vld [vmem:[%s1 + $0x348] sm:$0xff]
    %v146 = vld [vmem:[%s1 + $0x350] sm:$0xff]
    %v147 = vld [vmem:[%s1 + $0x358] sm:$0xff]
    %v148 = vld [vmem:[%s1 + $0x360] sm:$0xff]
    %v149 = vld [vmem:[%s1 + $0x368] sm:$0xff]
    %v150 = vld [vmem:[%s1 + $0x370] sm:$0xff]
    %v151 = vld [vmem:[%s1 + $0x378] sm:$0xff]
    %v152 = vld [vmem:[%s1 + $0x380] sm:$0xff]
    %v153 = vld [vmem:[%s1 + $0x388] sm:$0xff]
    %v154 = vld [vmem:[%s1 + $0x390] sm:$0xff]
    %v155 = vld [vmem:[%s1 + $0x398] sm:$0xff]
    %v156 = vld [vmem:[%s1 + $0x3a0] sm:$0xff]
    %v157 = vld [vmem:[%s1 + $0x3a8] sm:$0xff]
    %v158 = vld [vmem:[%s1 + $0x3b0] sm:$0xff]
    %v159 = vld [vmem:[%s1 + $0x3b8] sm:$0xff]
    %v160 = vld [vmem:[%s1 + $0x3c0] sm:$0xff]
    %v161 = vld [vmem:[%s1 + $0x3c8] sm:$0xff]
    %v162 = vld [vmem:[%s1 + $0x3d0] sm:$0xff]
    %v163 = vld [vmem:[%s1 + $0x3d8] sm:$0xff]
    %v164 = vld [vmem:[%s1 + $0x3e0] sm:$0xff]
    %v165 = vld [vmem:[%s1 + $0x3e8] sm:$0xff]
    %v166 = vld [vmem:[%s1 + $0x3f0] sm:$0xff]
    %v167 = vld [vmem:[%s1 + $0x3f8] sm:$0xff]
    %v168 = vld [vmem:[%s2] sm:$0xf]
    %v170 = vlaneseq
    %v171 = vshrl.u32 %v170, 7
    %v172 = vsub.s32 0, %v171
    %v173 = vrot.slane %v168, %v172
    %v174 = vlaneseq
    %v175 = vshrl.u32 %v174, 7
    %v176 = vsub.s32 1, %v175
    %v177 = vrot.slane %v168, %v176
    %v178 = vlaneseq
    %v179 = vshrl.u32 %v178, 7
    %v180 = vsub.s32 2, %v179
    %v181 = vrot.slane %v168, %v180
    %v182 = vlaneseq
    %v183 = vshrl.u32 %v182, 7
    %v184 = vsub.s32 3, %v183
    %v185 = vrot.slane %v168, %v184
    %v202 = vunpack.c.l.b16 %v28
    %v203 = vunpack.c.h.b16 %v28
    %v204 = vunpack.c.l.b16 %v29
    %v205 = vunpack.c.h.b16 %v29
    %v206 = vunpack.c.l.b16 %v30
    %v207 = vunpack.c.h.b16 %v30
    %v208 = vunpack.c.l.b16 %v31
    %v209 = vunpack.c.h.b16 %v31
    %v210 = vunpack.c.l.b16 %v32
    %v211 = vunpack.c.h.b16 %v32
    %v212 = vunpack.c.l.b16 %v33
    %v213 = vunpack.c.h.b16 %v33
    %v214 = vunpack.c.l.b16 %v34
    %v215 = vunpack.c.h.b16 %v34
    %v216 = vunpack.c.l.b16 %v35
    %v217 = vunpack.c.h.b16 %v35
    %v218 = vunpack.c.l.b16 %v36
    %v219 = vunpack.c.h.b16 %v36
    %v220 = vunpack.c.l.b16 %v37
    %v221 = vunpack.c.h.b16 %v37
    %v222 = vunpack.c.l.b16 %v38
    %v223 = vunpack.c.h.b16 %v38
    %v224 = vunpack.c.l.b16 %v39
    %v225 = vunpack.c.h.b16 %v39
    %v226 = vpack.c.b16 %v206, %v202
    %v227 = vpack.c.b16 %v207, %v203
    %v228 = vpack.c.b16 %v208, %v204
    %v229 = vpack.c.b16 %v209, %v205
    %v230 = vpack.c.b16 %v214, %v210
    %v231 = vpack.c.b16 %v215, %v211
    %v232 = vpack.c.b16 %v216, %v212
    %v233 = vpack.c.b16 %v217, %v213
    %v234 = vpack.c.b16 %v222, %v218
    %v235 = vpack.c.b16 %v223, %v219
    %v236 = vpack.c.b16 %v224, %v220
    %v237 = vpack.c.b16 %v225, %v221
    %v378 = vunpack.c.l.b16 %v40
    %v379 = vunpack.c.h.b16 %v40
    %v380 = vunpack.c.l.b16 %v41
    %v381 = vunpack.c.h.b16 %v41
    %v382 = vunpack.c.l.b16 %v42
    %v383 = vunpack.c.h.b16 %v42
    %v384 = vunpack.c.l.b16 %v43
    %v385 = vunpack.c.h.b16 %v43
    %v386 = vunpack.c.l.b16 %v44
    %v387 = vunpack.c.h.b16 %v44
    %v388 = vunpack.c.l.b16 %v45
    %v389 = vunpack.c.h.b16 %v45
    %v390 = vunpack.c.l.b16 %v46
    %v391 = vunpack.c.h.b16 %v46
    %v392 = vunpack.c.l.b16 %v47
    %v393 = vunpack.c.h.b16 %v47
    %v394 = vunpack.c.l.b16 %v48
    %v395 = vunpack.c.h.b16 %v48
    %v396 = vunpack.c.l.b16 %v49
    %v397 = vunpack.c.h.b16 %v49
    %v398 = vunpack.c.l.b16 %v50
    %v399 = vunpack.c.h.b16 %v50
    %v400 = vunpack.c.l.b16 %v51
    %v401 = vunpack.c.h.b16 %v51
    %v402 = vunpack.c.l.b16 %v52
    %v403 = vunpack.c.h.b16 %v52
    %v404 = vunpack.c.l.b16 %v53
    %v405 = vunpack.c.h.b16 %v53
    %v406 = vunpack.c.l.b16 %v54
    %v407 = vunpack.c.h.b16 %v54
    %v408 = vunpack.c.l.b16 %v55
    %v409 = vunpack.c.h.b16 %v55
    %v410 = vunpack.c.l.b16 %v56
    %v411 = vunpack.c.h.b16 %v56
    %v412 = vunpack.c.l.b16 %v57
    %v413 = vunpack.c.h.b16 %v57
    %v414 = vunpack.c.l.b16 %v58
    %v415 = vunpack.c.h.b16 %v58
    %v416 = vunpack.c.l.b16 %v59
    %v417 = vunpack.c.h.b16 %v59
    %v418 = vunpack.c.l.b16 %v60
    %v419 = vunpack.c.h.b16 %v60
    %v420 = vunpack.c.l.b16 %v61
    %v421 = vunpack.c.h.b16 %v61
    %v422 = vunpack.c.l.b16 %v62
    %v423 = vunpack.c.h.b16 %v62
    %v424 = vunpack.c.l.b16 %v63
    %v425 = vunpack.c.h.b16 %v63
    %v426 = vunpack.c.l.b16 %v64
    %v427 = vunpack.c.h.b16 %v64
    %v428 = vunpack.c.l.b16 %v65
    %v429 = vunpack.c.h.b16 %v65
    %v430 = vunpack.c.l.b16 %v66
    %v431 = vunpack.c.h.b16 %v66
    %v432 = vunpack.c.l.b16 %v67
    %v433 = vunpack.c.h.b16 %v67
    %v434 = vunpack.c.l.b16 %v68
    %v435 = vunpack.c.h.b16 %v68
    %v436 = vunpack.c.l.b16 %v69
    %v437 = vunpack.c.h.b16 %v69
    %v438 = vunpack.c.l.b16 %v70
    %v439 = vunpack.c.h.b16 %v70
    %v440 = vunpack.c.l.b16 %v71
    %v441 = vunpack.c.h.b16 %v71
    %v442 = vunpack.c.l.b16 %v72
    %v443 = vunpack.c.h.b16 %v72
    %v444 = vunpack.c.l.b16 %v73
    %v445 = vunpack.c.h.b16 %v73
    %v446 = vunpack.c.l.b16 %v74
    %v447 = vunpack.c.h.b16 %v74
    %v448 = vunpack.c.l.b16 %v75
    %v449 = vunpack.c.h.b16 %v75
    %v450 = vunpack.c.l.b16 %v76
    %v451 = vunpack.c.h.b16 %v76
    %v452 = vunpack.c.l.b16 %v77
    %v453 = vunpack.c.h.b16 %v77
    %v454 = vunpack.c.l.b16 %v78
    %v455 = vunpack.c.h.b16 %v78
    %v456 = vunpack.c.l.b16 %v79
    %v457 = vunpack.c.h.b16 %v79
    %v458 = vunpack.c.l.b16 %v80
    %v459 = vunpack.c.h.b16 %v80
    %v460 = vunpack.c.l.b16 %v81
    %v461 = vunpack.c.h.b16 %v81
    %v462 = vunpack.c.l.b16 %v82
    %v463 = vunpack.c.h.b16 %v82
    %v464 = vunpack.c.l.b16 %v83
    %v465 = vunpack.c.h.b16 %v83
    %v466 = vunpack.c.l.b16 %v84
    %v467 = vunpack.c.h.b16 %v84
    %v468 = vunpack.c.l.b16 %v85
    %v469 = vunpack.c.h.b16 %v85
    %v470 = vunpack.c.l.b16 %v86
    %v471 = vunpack.c.h.b16 %v86
    %v472 = vunpack.c.l.b16 %v87
    %v473 = vunpack.c.h.b16 %v87
    %v474 = vunpack.c.l.b16 %v88
    %v475 = vunpack.c.h.b16 %v88
    %v476 = vunpack.c.l.b16 %v89
    %v477 = vunpack.c.h.b16 %v89
    %v478 = vunpack.c.l.b16 %v90
    %v479 = vunpack.c.h.b16 %v90
    %v480 = vunpack.c.l.b16 %v91
    %v481 = vunpack.c.h.b16 %v91
    %v482 = vunpack.c.l.b16 %v92
    %v483 = vunpack.c.h.b16 %v92
    %v484 = vunpack.c.l.b16 %v93
    %v485 = vunpack.c.h.b16 %v93
    %v486 = vunpack.c.l.b16 %v94
    %v487 = vunpack.c.h.b16 %v94
    %v488 = vunpack.c.l.b16 %v95
    %v489 = vunpack.c.h.b16 %v95
    %v490 = vunpack.c.l.b16 %v96
    %v491 = vunpack.c.h.b16 %v96
    %v492 = vunpack.c.l.b16 %v97
    %v493 = vunpack.c.h.b16 %v97
    %v494 = vunpack.c.l.b16 %v98
    %v495 = vunpack.c.h.b16 %v98
    %v496 = vunpack.c.l.b16 %v99
    %v497 = vunpack.c.h.b16 %v99
    %v498 = vunpack.c.l.b16 %v100
    %v499 = vunpack.c.h.b16 %v100
    %v500 = vunpack.c.l.b16 %v101
    %v501 = vunpack.c.h.b16 %v101
    %v502 = vunpack.c.l.b16 %v102
    %v503 = vunpack.c.h.b16 %v102
    %v504 = vunpack.c.l.b16 %v103
    %v505 = vunpack.c.h.b16 %v103
    %v506 = vunpack.c.l.b16 %v104
    %v507 = vunpack.c.h.b16 %v104
    %v508 = vunpack.c.l.b16 %v105
    %v509 = vunpack.c.h.b16 %v105
    %v510 = vunpack.c.l.b16 %v106
    %v511 = vunpack.c.h.b16 %v106
    %v512 = vunpack.c.l.b16 %v107
    %v513 = vunpack.c.h.b16 %v107
    %v514 = vunpack.c.l.b16 %v108
    %v515 = vunpack.c.h.b16 %v108
    %v516 = vunpack.c.l.b16 %v109
    %v517 = vunpack.c.h.b16 %v109
    %v518 = vunpack.c.l.b16 %v110
    %v519 = vunpack.c.h.b16 %v110
    %v520 = vunpack.c.l.b16 %v111
    %v521 = vunpack.c.h.b16 %v111
    %v522 = vunpack.c.l.b16 %v112
    %v523 = vunpack.c.h.b16 %v112
    %v524 = vunpack.c.l.b16 %v113
    %v525 = vunpack.c.h.b16 %v113
    %v526 = vunpack.c.l.b16 %v114
    %v527 = vunpack.c.h.b16 %v114
    %v528 = vunpack.c.l.b16 %v115
    %v529 = vunpack.c.h.b16 %v115
    %v530 = vunpack.c.l.b16 %v116
    %v531 = vunpack.c.h.b16 %v116
    %v532 = vunpack.c.l.b16 %v117
    %v533 = vunpack.c.h.b16 %v117
    %v534 = vunpack.c.l.b16 %v118
    %v535 = vunpack.c.h.b16 %v118
    %v536 = vunpack.c.l.b16 %v119
    %v537 = vunpack.c.h.b16 %v119
    %v538 = vunpack.c.l.b16 %v120
    %v539 = vunpack.c.h.b16 %v120
    %v540 = vunpack.c.l.b16 %v121
    %v541 = vunpack.c.h.b16 %v121
    %v542 = vunpack.c.l.b16 %v122
    %v543 = vunpack.c.h.b16 %v122
    %v544 = vunpack.c.l.b16 %v123
    %v545 = vunpack.c.h.b16 %v123
    %v546 = vunpack.c.l.b16 %v124
    %v547 = vunpack.c.h.b16 %v124
    %v548 = vunpack.c.l.b16 %v125
    %v549 = vunpack.c.h.b16 %v125
    %v550 = vunpack.c.l.b16 %v126
    %v551 = vunpack.c.h.b16 %v126
    %v552 = vunpack.c.l.b16 %v127
    %v553 = vunpack.c.h.b16 %v127
    %v554 = vunpack.c.l.b16 %v128
    %v555 = vunpack.c.h.b16 %v128
    %v556 = vunpack.c.l.b16 %v129
    %v557 = vunpack.c.h.b16 %v129
    %v558 = vunpack.c.l.b16 %v130
    %v559 = vunpack.c.h.b16 %v130
    %v560 = vunpack.c.l.b16 %v131
    %v561 = vunpack.c.h.b16 %v131
    %v562 = vunpack.c.l.b16 %v132
    %v563 = vunpack.c.h.b16 %v132
    %v564 = vunpack.c.l.b16 %v133
    %v565 = vunpack.c.h.b16 %v133
    %v566 = vunpack.c.l.b16 %v134
    %v567 = vunpack.c.h.b16 %v134
    %v568 = vunpack.c.l.b16 %v135
    %v569 = vunpack.c.h.b16 %v135
    %v570 = vunpack.c.l.b16 %v136
    %v571 = vunpack.c.h.b16 %v136
    %v572 = vunpack.c.l.b16 %v137
    %v573 = vunpack.c.h.b16 %v137
    %v574 = vunpack.c.l.b16 %v138
    %v575 = vunpack.c.h.b16 %v138
    %v576 = vunpack.c.l.b16 %v139
    %v577 = vunpack.c.h.b16 %v139
    %v578 = vunpack.c.l.b16 %v140
    %v579 = vunpack.c.h.b16 %v140
    %v580 = vunpack.c.l.b16 %v141
    %v581 = vunpack.c.h.b16 %v141
    %v582 = vunpack.c.l.b16 %v142
    %v583 = vunpack.c.h.b16 %v142
    %v584 = vunpack.c.l.b16 %v143
    %v585 = vunpack.c.h.b16 %v143
    %v586 = vunpack.c.l.b16 %v144
    %v587 = vunpack.c.h.b16 %v144
    %v588 = vunpack.c.l.b16 %v145
    %v589 = vunpack.c.h.b16 %v145
    %v590 = vunpack.c.l.b16 %v146
    %v591 = vunpack.c.h.b16 %v146
    %v592 = vunpack.c.l.b16 %v147
    %v593 = vunpack.c.h.b16 %v147
    %v594 = vunpack.c.l.b16 %v148
    %v595 = vunpack.c.h.b16 %v148
    %v596 = vunpack.c.l.b16 %v149
    %v597 = vunpack.c.h.b16 %v149
    %v598 = vunpack.c.l.b16 %v150
    %v599 = vunpack.c.h.b16 %v150
    %v600 = vunpack.c.l.b16 %v151
    %v601 = vunpack.c.h.b16 %v151
    %v602 = vunpack.c.l.b16 %v152
    %v603 = vunpack.c.h.b16 %v152
    %v604 = vunpack.c.l.b16 %v153
    %v605 = vunpack.c.h.b16 %v153
    %v606 = vunpack.c.l.b16 %v154
    %v607 = vunpack.c.h.b16 %v154
    %v608 = vunpack.c.l.b16 %v155
    %v609 = vunpack.c.h.b16 %v155
    %v610 = vunpack.c.l.b16 %v156
    %v611 = vunpack.c.h.b16 %v156
    %v612 = vunpack.c.l.b16 %v157
    %v613 = vunpack.c.h.b16 %v157
    %v614 = vunpack.c.l.b16 %v158
    %v615 = vunpack.c.h.b16 %v158
    %v616 = vunpack.c.l.b16 %v159
    %v617 = vunpack.c.h.b16 %v159
    %v618 = vunpack.c.l.b16 %v160
    %v619 = vunpack.c.h.b16 %v160
    %v620 = vunpack.c.l.b16 %v161
    %v621 = vunpack.c.h.b16 %v161
    %v622 = vunpack.c.l.b16 %v162
    %v623 = vunpack.c.h.b16 %v162
    %v624 = vunpack.c.l.b16 %v163
    %v625 = vunpack.c.h.b16 %v163
    %v626 = vunpack.c.l.b16 %v164
    %v627 = vunpack.c.h.b16 %v164
    %v628 = vunpack.c.l.b16 %v165
    %v629 = vunpack.c.h.b16 %v165
    %v630 = vunpack.c.l.b16 %v166
    %v631 = vunpack.c.h.b16 %v166
    %v632 = vunpack.c.l.b16 %v167
    %v633 = vunpack.c.h.b16 %v167
    %v634 = vpack.c.b16 %v382, %v378
    %v635 = vpack.c.b16 %v383, %v379
    %v636 = vpack.c.b16 %v384, %v380
    %v637 = vpack.c.b16 %v385, %v381
    %v638 = vpack.c.b16 %v390, %v386
    %v639 = vpack.c.b16 %v391, %v387
    %v640 = vpack.c.b16 %v392, %v388
    %v641 = vpack.c.b16 %v393, %v389
    %v642 = vpack.c.b16 %v398, %v394
    %v643 = vpack.c.b16 %v399, %v395
    %v644 = vpack.c.b16 %v400, %v396
    %v645 = vpack.c.b16 %v401, %v397
    %v646 = vpack.c.b16 %v406, %v402
    %v647 = vpack.c.b16 %v407, %v403
    %v648 = vpack.c.b16 %v408, %v404
    %v649 = vpack.c.b16 %v409, %v405
    %v650 = vpack.c.b16 %v414, %v410
    %v651 = vpack.c.b16 %v415, %v411
    %v652 = vpack.c.b16 %v416, %v412
    %v653 = vpack.c.b16 %v417, %v413
    %v654 = vpack.c.b16 %v422, %v418
    %v655 = vpack.c.b16 %v423, %v419
    %v656 = vpack.c.b16 %v424, %v420
    %v657 = vpack.c.b16 %v425, %v421
    %v658 = vpack.c.b16 %v430, %v426
    %v659 = vpack.c.b16 %v431, %v427
    %v660 = vpack.c.b16 %v432, %v428
    %v661 = vpack.c.b16 %v433, %v429
    %v662 = vpack.c.b16 %v438, %v434
    %v663 = vpack.c.b16 %v439, %v435
    %v664 = vpack.c.b16 %v440, %v436
    %v665 = vpack.c.b16 %v441, %v437
    %v666 = vpack.c.b16 %v446, %v442
    %v667 = vpack.c.b16 %v447, %v443
    %v668 = vpack.c.b16 %v448, %v444
    %v669 = vpack.c.b16 %v449, %v445
    %v670 = vpack.c.b16 %v454, %v450
    %v671 = vpack.c.b16 %v455, %v451
    %v672 = vpack.c.b16 %v456, %v452
    %v673 = vpack.c.b16 %v457, %v453
    %v674 = vpack.c.b16 %v462, %v458
    %v675 = vpack.c.b16 %v463, %v459
    %v676 = vpack.c.b16 %v464, %v460
    %v677 = vpack.c.b16 %v465, %v461
    %v678 = vpack.c.b16 %v470, %v466
    %v679 = vpack.c.b16 %v471, %v467
    %v680 = vpack.c.b16 %v472, %v468
    %v681 = vpack.c.b16 %v473, %v469
    %v682 = vpack.c.b16 %v478, %v474
    %v683 = vpack.c.b16 %v479, %v475
    %v684 = vpack.c.b16 %v480, %v476
    %v685 = vpack.c.b16 %v481, %v477
    %v686 = vpack.c.b16 %v486, %v482
    %v687 = vpack.c.b16 %v487, %v483
    %v688 = vpack.c.b16 %v488, %v484
    %v689 = vpack.c.b16 %v489, %v485
    %v690 = vpack.c.b16 %v494, %v490
    %v691 = vpack.c.b16 %v495, %v491
    %v692 = vpack.c.b16 %v496, %v492
    %v693 = vpack.c.b16 %v497, %v493
    %v694 = vpack.c.b16 %v502, %v498
    %v695 = vpack.c.b16 %v503, %v499
    %v696 = vpack.c.b16 %v504, %v500
    %v697 = vpack.c.b16 %v505, %v501
    %v698 = vpack.c.b16 %v510, %v506
    %v699 = vpack.c.b16 %v511, %v507
    %v700 = vpack.c.b16 %v512, %v508
    %v701 = vpack.c.b16 %v513, %v509
    %v702 = vpack.c.b16 %v518, %v514
    %v703 = vpack.c.b16 %v519, %v515
    %v704 = vpack.c.b16 %v520, %v516
    %v705 = vpack.c.b16 %v521, %v517
    %v706 = vpack.c.b16 %v526, %v522
    %v707 = vpack.c.b16 %v527, %v523
    %v708 = vpack.c.b16 %v528, %v524
    %v709 = vpack.c.b16 %v529, %v525
    %v710 = vpack.c.b16 %v534, %v530
    %v711 = vpack.c.b16 %v535, %v531
    %v712 = vpack.c.b16 %v536, %v532
    %v713 = vpack.c.b16 %v537, %v533
    %v714 = vpack.c.b16 %v542, %v538
    %v715 = vpack.c.b16 %v543, %v539
    %v716 = vpack.c.b16 %v544, %v540
    %v717 = vpack.c.b16 %v545, %v541
    %v718 = vpack.c.b16 %v550, %v546
    %v719 = vpack.c.b16 %v551, %v547
    %v720 = vpack.c.b16 %v552, %v548
    %v721 = vpack.c.b16 %v553, %v549
    %v722 = vpack.c.b16 %v558, %v554
    %v723 = vpack.c.b16 %v559, %v555
    %v724 = vpack.c.b16 %v560, %v556
    %v725 = vpack.c.b16 %v561, %v557
    %v726 = vpack.c.b16 %v566, %v562
    %v727 = vpack.c.b16 %v567, %v563
    %v728 = vpack.c.b16 %v568, %v564
    %v729 = vpack.c.b16 %v569, %v565
    %v730 = vpack.c.b16 %v574, %v570
    %v731 = vpack.c.b16 %v575, %v571
    %v732 = vpack.c.b16 %v576, %v572
    %v733 = vpack.c.b16 %v577, %v573
    %v734 = vpack.c.b16 %v582, %v578
    %v735 = vpack.c.b16 %v583, %v579
    %v736 = vpack.c.b16 %v584, %v580
    %v737 = vpack.c.b16 %v585, %v581
    %v738 = vpack.c.b16 %v590, %v586
    %v739 = vpack.c.b16 %v591, %v587
    %v740 = vpack.c.b16 %v592, %v588
    %v741 = vpack.c.b16 %v593, %v589
    %v742 = vpack.c.b16 %v598, %v594
    %v743 = vpack.c.b16 %v599, %v595
    %v744 = vpack.c.b16 %v600, %v596
    %v745 = vpack.c.b16 %v601, %v597
    %v746 = vpack.c.b16 %v606, %v602
    %v747 = vpack.c.b16 %v607, %v603
    %v748 = vpack.c.b16 %v608, %v604
    %v749 = vpack.c.b16 %v609, %v605
    %v750 = vpack.c.b16 %v614, %v610
    %v751 = vpack.c.b16 %v615, %v611
    %v752 = vpack.c.b16 %v616, %v612
    %v753 = vpack.c.b16 %v617, %v613
    %v754 = vpack.c.b16 %v622, %v618
    %v755 = vpack.c.b16 %v623, %v619
    %v756 = vpack.c.b16 %v624, %v620
    %v757 = vpack.c.b16 %v625, %v621
    %v758 = vpack.c.b16 %v630, %v626
    %v759 = vpack.c.b16 %v631, %v627
    %v760 = vpack.c.b16 %v632, %v628
    %v761 = vpack.c.b16 %v633, %v629
    %890 = vmatprep.subr.bf16.mxu0 %v635
    %891 = vmatpush1.bf16.msra.mxu0 %v634
    %892 = vmatprep.subr.bf16.mxu0 %v639
    %893 = vmatpush1.bf16.msra.mxu0 %v638
    %894 = vmatprep.subr.bf16.mxu0 %v643
    %895 = vmatpush1.bf16.msra.mxu0 %v642
    %896 = vmatprep.subr.bf16.mxu0 %v647
    %897 = vmatpush1.bf16.msra.mxu0 %v646
    %898 = vmatprep.subr.bf16.mxu0 %v651
    %899 = vmatpush1.bf16.msra.mxu0 %v650
    %900 = vmatprep.subr.bf16.mxu0 %v655
    %901 = vmatpush1.bf16.msra.mxu0 %v654
    %902 = vmatprep.subr.bf16.mxu0 %v659
    %903 = vmatpush1.bf16.msra.mxu0 %v658
    %904 = vmatprep.subr.bf16.mxu0 %v663
    %905 = vmatpush1.bf16.msra.mxu0 %v662
    %906 = vmatprep.subr.bf16.mxu0 %v667
    %907 = vmatpush1.bf16.msra.mxu0 %v666
    %908 = vmatprep.subr.bf16.mxu0 %v671
    %909 = vmatpush1.bf16.msra.mxu0 %v670
    %910 = vmatprep.subr.bf16.mxu0 %v675
    %911 = vmatpush1.bf16.msra.mxu0 %v674
    %912 = vmatprep.subr.bf16.mxu0 %v679
    %913 = vmatpush1.bf16.msra.mxu0 %v678
    %914 = vmatprep.subr.bf16.mxu0 %v683
    %915 = vmatpush1.bf16.msra.mxu0 %v682
    %916 = vmatprep.subr.bf16.mxu0 %v687
    %917 = vmatpush1.bf16.msra.mxu0 %v686
    %918 = vmatprep.subr.bf16.mxu0 %v691
    %919 = vmatpush1.bf16.msra.mxu0 %v690
    %920 = vmatprep.subr.bf16.mxu0 %v695
    %921 = vmatpush1.bf16.msra.mxu0 %v694
    %922 = vmatprep.mubr.bf16.mxu0 %v227
    %923 = vmatmul.mubr.bf16.gmra.mrb[0].mxu0 %v226
    %v924 = vpop.f32.mrb[0].mxu0
    %v925 = vadd.f32 %v173, %v924
    %v926 = vpop.f32.mrb[0].mxu0
    %v927 = vadd.f32 %v177, %v926
    %v928 = vpop.f32.mrb[0].mxu0
    %v929 = vadd.f32 %v173, %v928
    %v930 = vpop.f32.mrb[0].mxu0
    %v931 = vadd.f32 %v177, %v930
    %932 = vmatprep.mubr.bf16.mxu0 %v231
    %933 = vmatmul.mubr.bf16.gmra.mrb[0].mxu0 %v230
    %v934 = vpop.f32.mrb[0].mxu0
    %v935 = vadd.f32 %v173, %v934
    %v936 = vpop.f32.mrb[0].mxu0
    %v937 = vadd.f32 %v177, %v936
    %v938 = vpop.f32.mrb[0].mxu0
    %v939 = vadd.f32 %v173, %v938
    %v940 = vpop.f32.mrb[0].mxu0
    %v941 = vadd.f32 %v177, %v940
    %942 = vmatprep.mubr.bf16.mxu0 %v235
    %943 = vmatmul.mubr.bf16.gmra.mrb[0].mxu0 %v234
    %v944 = vpop.f32.mrb[0].mxu0
    %v945 = vadd.f32 %v173, %v944
    %v946 = vpop.f32.mrb[0].mxu0
    %v947 = vadd.f32 %v177, %v946
    %v948 = vpop.f32.mrb[0].mxu0
    %v949 = vadd.f32 %v173, %v948
    %v950 = vpop.f32.mrb[0].mxu0
    %v951 = vadd.f32 %v177, %v950
    %952 = vdwg.mxu0
    %953 = vmatprep.subr.bf16.mxu0 %v699
    %954 = vmatpush1.bf16.msra.mxu0 %v698
    %955 = vmatprep.subr.bf16.mxu0 %v703
    %956 = vmatpush1.bf16.msra.mxu0 %v702
    %957 = vmatprep.subr.bf16.mxu0 %v707
    %958 = vmatpush1.bf16.msra.mxu0 %v706
    %959 = vmatprep.subr.bf16.mxu0 %v711
    %960 = vmatpush1.bf16.msra.mxu0 %v710
    %961 = vmatprep.subr.bf16.mxu0 %v715
    %962 = vmatpush1.bf16.msra.mxu0 %v714
    %963 = vmatprep.subr.bf16.mxu0 %v719
    %964 = vmatpush1.bf16.msra.mxu0 %v718
    %965 = vmatprep.subr.bf16.mxu0 %v723
    %966 = vmatpush1.bf16.msra.mxu0 %v722
    %967 = vmatprep.subr.bf16.mxu0 %v727
    %968 = vmatpush1.bf16.msra.mxu0 %v726
    %969 = vmatprep.subr.bf16.mxu0 %v731
    %970 = vmatpush1.bf16.msra.mxu0 %v730
    %971 = vmatprep.subr.bf16.mxu0 %v735
    %972 = vmatpush1.bf16.msra.mxu0 %v734
    %973 = vmatprep.subr.bf16.mxu0 %v739
    %974 = vmatpush1.bf16.msra.mxu0 %v738
    %975 = vmatprep.subr.bf16.mxu0 %v743
    %976 = vmatpush1.bf16.msra.mxu0 %v742
    %977 = vmatprep.subr.bf16.mxu0 %v747
    %978 = vmatpush1.bf16.msra.mxu0 %v746
    %979 = vmatprep.subr.bf16.mxu0 %v751
    %980 = vmatpush1.bf16.msra.mxu0 %v750
    %981 = vmatprep.subr.bf16.mxu0 %v755
    %982 = vmatpush1.bf16.msra.mxu0 %v754
    %983 = vmatprep.subr.bf16.mxu0 %v759
    %984 = vmatpush1.bf16.msra.mxu0 %v758
    %985 = vmatprep.mubr.bf16.mxu0 %v229
    %986 = vmatmul.mubr.bf16.gmra.mrb[0].mxu0 %v228
    %v987 = vpop.f32.mrb[0].mxu0
    %v988 = vadd.f32 %v925, %v987
    %v989 = vpop.f32.mrb[0].mxu0
    %v990 = vadd.f32 %v927, %v989
    %v991 = vpop.f32.mrb[0].mxu0
    %v992 = vadd.f32 %v929, %v991
    %v993 = vpop.f32.mrb[0].mxu0
    %v994 = vadd.f32 %v931, %v993
    %995 = vmatprep.mubr.bf16.mxu0 %v233
    %996 = vmatmul.mubr.bf16.gmra.mrb[0].mxu0 %v232
    %v997 = vpop.f32.mrb[0].mxu0
    %v998 = vadd.f32 %v935, %v997
    %v999 = vpop.f32.mrb[0].mxu0
    %v1000 = vadd.f32 %v937, %v999
    %v1001 = vpop.f32.mrb[0].mxu0
    %v1002 = vadd.f32 %v939, %v1001
    %v1003 = vpop.f32.mrb[0].mxu0
    %v1004 = vadd.f32 %v941, %v1003
    %1005 = vmatprep.mubr.bf16.mxu0 %v237
    %1006 = vmatmul.mubr.bf16.gmra.mrb[0].mxu0 %v236
    %v1007 = vpop.f32.mrb[0].mxu0
    %v1008 = vadd.f32 %v945, %v1007
    %v1009 = vpop.f32.mrb[0].mxu0
    %v1010 = vadd.f32 %v947, %v1009
    %v1011 = vpop.f32.mrb[0].mxu0
    %v1012 = vadd.f32 %v949, %v1011
    %v1013 = vpop.f32.mrb[0].mxu0
    %v1014 = vadd.f32 %v951, %v1013
    %1015 = vdwg.mxu0
    %1016 = vmatprep.subr.bf16.mxu0 %v637
    %1017 = vmatpush1.bf16.msra.mxu0 %v636
    %1018 = vmatprep.subr.bf16.mxu0 %v641
    %1019 = vmatpush1.bf16.msra.mxu0 %v640
    %1020 = vmatprep.subr.bf16.mxu0 %v645
    %1021 = vmatpush1.bf16.msra.mxu0 %v644
    %1022 = vmatprep.subr.bf16.mxu0 %v649
    %1023 = vmatpush1.bf16.msra.mxu0 %v648
    %1024 = vmatprep.subr.bf16.mxu0 %v653
    %1025 = vmatpush1.bf16.msra.mxu0 %v652
    %1026 = vmatprep.subr.bf16.mxu0 %v657
    %1027 = vmatpush1.bf16.msra.mxu0 %v656
    %1028 = vmatprep.subr.bf16.mxu0 %v661
    %1029 = vmatpush1.bf16.msra.mxu0 %v660
    %1030 = vmatprep.subr.bf16.mxu0 %v665
    %1031 = vmatpush1.bf16.msra.mxu0 %v664
    %1032 = vmatprep.subr.bf16.mxu0 %v669
    %1033 = vmatpush1.bf16.msra.mxu0 %v668
    %1034 = vmatprep.subr.bf16.mxu0 %v673
    %1035 = vmatpush1.bf16.msra.mxu0 %v672
    %1036 = vmatprep.subr.bf16.mxu0 %v677
    %1037 = vmatpush1.bf16.msra.mxu0 %v676
    %1038 = vmatprep.subr.bf16.mxu0 %v681
    %1039 = vmatpush1.bf16.msra.mxu0 %v680
    %1040 = vmatprep.subr.bf16.mxu0 %v685
    %1041 = vmatpush1.bf16.msra.mxu0 %v684
    %1042 = vmatprep.subr.bf16.mxu0 %v689
    %1043 = vmatpush1.bf16.msra.mxu0 %v688
    %1044 = vmatprep.subr.bf16.mxu0 %v693
    %1045 = vmatpush1.bf16.msra.mxu0 %v692
    %1046 = vmatprep.subr.bf16.mxu0 %v697
    %1047 = vmatpush1.bf16.msra.mxu0 %v696
    %1048 = vmatprep.mubr.bf16.mxu0 %v227
    %1049 = vmatmul.mubr.bf16.gmra.mrb[0].mxu0 %v226
    %v1050 = vpop.f32.mrb[0].mxu0
    %v1051 = vadd.f32 %v181, %v1050
    %v1052 = vpop.f32.mrb[0].mxu0
    %v1053 = vadd.f32 %v185, %v1052
    %v1054 = vpop.f32.mrb[0].mxu0
    %v1055 = vadd.f32 %v181, %v1054
    %v1056 = vpop.f32.mrb[0].mxu0
    %v1057 = vadd.f32 %v185, %v1056
    %1058 = vmatprep.mubr.bf16.mxu0 %v231
    %1059 = vmatmul.mubr.bf16.gmra.mrb[0].mxu0 %v230
    %v1060 = vpop.f32.mrb[0].mxu0
    %v1061 = vadd.f32 %v181, %v1060
    %v1062 = vpop.f32.mrb[0].mxu0
    %v1063 = vadd.f32 %v185, %v1062
    %v1064 = vpop.f32.mrb[0].mxu0
    %v1065 = vadd.f32 %v181, %v1064
    %v1066 = vpop.f32.mrb[0].mxu0
    %v1067 = vadd.f32 %v185, %v1066
    %1068 = vmatprep.mubr.bf16.mxu0 %v235
    %1069 = vmatmul.mubr.bf16.gmra.mrb[0].mxu0 %v234
    %v1070 = vpop.f32.mrb[0].mxu0
    %v1071 = vadd.f32 %v181, %v1070
    %v1072 = vpop.f32.mrb[0].mxu0
    %v1073 = vadd.f32 %v185, %v1072
    %v1074 = vpop.f32.mrb[0].mxu0
    %v1075 = vadd.f32 %v181, %v1074
    %v1076 = vpop.f32.mrb[0].mxu0
    %v1077 = vadd.f32 %v185, %v1076
    %1078 = vdwg.mxu0
    %1079 = vmatprep.subr.bf16.mxu0 %v701
    %1080 = vmatpush1.bf16.msra.mxu0 %v700
    %1081 = vmatprep.subr.bf16.mxu0 %v705
    %1082 = vmatpush1.bf16.msra.mxu0 %v704
    %1083 = vmatprep.subr.bf16.mxu0 %v709
    %1084 = vmatpush1.bf16.msra.mxu0 %v708
    %1085 = vmatprep.subr.bf16.mxu0 %v713
    %1086 = vmatpush1.bf16.msra.mxu0 %v712
    %1087 = vmatprep.subr.bf16.mxu0 %v717
    %1088 = vmatpush1.bf16.msra.mxu0 %v716
    %1089 = vmatprep.subr.bf16.mxu0 %v721
    %1090 = vmatpush1.bf16.msra.mxu0 %v720
    %1091 = vmatprep.subr.bf16.mxu0 %v725
    %1092 = vmatpush1.bf16.msra.mxu0 %v724
    %1093 = vmatprep.subr.bf16.mxu0 %v729
    %1094 = vmatpush1.bf16.msra.mxu0 %v728
    %1095 = vmatprep.subr.bf16.mxu0 %v733
    %1096 = vmatpush1.bf16.msra.mxu0 %v732
    %1097 = vmatprep.subr.bf16.mxu0 %v737
    %1098 = vmatpush1.bf16.msra.mxu0 %v736
    %1099 = vmatprep.subr.bf16.mxu0 %v741
    %1100 = vmatpush1.bf16.msra.mxu0 %v740
    %1101 = vmatprep.subr.bf16.mxu0 %v745
    %1102 = vmatpush1.bf16.msra.mxu0 %v744
    %1103 = vmatprep.subr.bf16.mxu0 %v749
    %1104 = vmatpush1.bf16.msra.mxu0 %v748
    %1105 = vmatprep.subr.bf16.mxu0 %v753
    %1106 = vmatpush1.bf16.msra.mxu0 %v752
    %1107 = vmatprep.subr.bf16.mxu0 %v757
    %1108 = vmatpush1.bf16.msra.mxu0 %v756
    %1109 = vmatprep.subr.bf16.mxu0 %v761
    %1110 = vmatpush1.bf16.msra.mxu0 %v760
    %1111 = vmatprep.mubr.bf16.mxu0 %v229
    %1112 = vmatmul.mubr.bf16.gmra.mrb[0].mxu0 %v228
    %v1113 = vpop.f32.mrb[0].mxu0
    %v1114 = vadd.f32 %v1051, %v1113
    %v1115 = vpop.f32.mrb[0].mxu0
    %v1116 = vadd.f32 %v1053, %v1115
    %v1117 = vpop.f32.mrb[0].mxu0
    %v1118 = vadd.f32 %v1055, %v1117
    %v1119 = vpop.f32.mrb[0].mxu0
    %v1120 = vadd.f32 %v1057, %v1119
    %1121 = vmatprep.mubr.bf16.mxu0 %v233
    %1122 = vmatmul.mubr.bf16.gmra.mrb[0].mxu0 %v232
    %v1123 = vpop.f32.mrb[0].mxu0
    %v1124 = vadd.f32 %v1061, %v1123
    %v1125 = vpop.f32.mrb[0].mxu0
    %v1126 = vadd.f32 %v1063, %v1125
    %v1127 = vpop.f32.mrb[0].mxu0
    %v1128 = vadd.f32 %v1065, %v1127
    %v1129 = vpop.f32.mrb[0].mxu0
    %v1130 = vadd.f32 %v1067, %v1129
    %1131 = vmatprep.mubr.bf16.mxu0 %v237
    %1132 = vmatmul.mubr.bf16.gmra.mrb[0].mxu0 %v236
    %v1133 = vpop.f32.mrb[0].mxu0
    %v1134 = vadd.f32 %v1071, %v1133
    %v1135 = vpop.f32.mrb[0].mxu0
    %v1136 = vadd.f32 %v1073, %v1135
    %v1137 = vpop.f32.mrb[0].mxu0
    %v1138 = vadd.f32 %v1075, %v1137
    %v1139 = vpop.f32.mrb[0].mxu0
    %v1140 = vadd.f32 %v1077, %v1139
    %1141 = vdwg.mxu0
    %v1142 = vmax.f32 %v988, 0.0
    %v1143 = vmax.f32 %v990, 0.0
    %v1144 = vmax.f32 %v1114, 0.0
    %v1145 = vmax.f32 %v1116, 0.0
    %v1146 = vmax.f32 %v992, 0.0
    %v1147 = vmax.f32 %v994, 0.0
    %v1148 = vmax.f32 %v1118, 0.0
    %v1149 = vmax.f32 %v1120, 0.0
    %v1150 = vmax.f32 %v998, 0.0
    %v1151 = vmax.f32 %v1000, 0.0
    %v1152 = vmax.f32 %v1124, 0.0
    %v1153 = vmax.f32 %v1126, 0.0
    %v1154 = vmax.f32 %v1002, 0.0
    %v1155 = vmax.f32 %v1004, 0.0
    %v1156 = vmax.f32 %v1128, 0.0
    %v1157 = vmax.f32 %v1130, 0.0
    %v1158 = vmax.f32 %v1008, 0.0
    %v1159 = vmax.f32 %v1010, 0.0
    %v1160 = vmax.f32 %v1134, 0.0
    %v1161 = vmax.f32 %v1136, 0.0
    %v1162 = vmax.f32 %v1012, 0.0
    %v1163 = vmax.f32 %v1014, 0.0
    %v1164 = vmax.f32 %v1138, 0.0
    %v1165 = vmax.f32 %v1140, 0.0
    %1166 = vst [vmem:[%s6] sm:$0xff] %v1142
    %1167 = vst [vmem:[%s6 + $0x8] sm:$0xff] %v1143
    %1168 = vst [vmem:[%s6 + $0x10] sm:$0xff] %v1144
    %1169 = vst [vmem:[%s6 + $0x18] sm:$0xff] %v1145
    %1170 = vst [vmem:[%s6 + $0x20] sm:$0xff] %v1146
    %1171 = vst [vmem:[%s6 + $0x28] sm:$0xff] %v1147
    %1172 = vst [vmem:[%s6 + $0x30] sm:$0xff] %v1148
    %1173 = vst [vmem:[%s6 + $0x38] sm:$0xff] %v1149
    %1174 = vst [vmem:[%s6 + $0x40] sm:$0xff] %v1150
    %1175 = vst [vmem:[%s6 + $0x48] sm:$0xff] %v1151
    %1176 = vst [vmem:[%s6 + $0x50] sm:$0xff] %v1152
    %1177 = vst [vmem:[%s6 + $0x58] sm:$0xff] %v1153
    %1178 = vst [vmem:[%s6 + $0x60] sm:$0xff] %v1154
    %1179 = vst [vmem:[%s6 + $0x68] sm:$0xff] %v1155
    %1180 = vst [vmem:[%s6 + $0x70] sm:$0xff] %v1156
    %1181 = vst [vmem:[%s6 + $0x78] sm:$0xff] %v1157
    %1182 = vst [vmem:[%s6 + $0x80] sm:$0xff] %v1158
    %1183 = vst [vmem:[%s6 + $0x88] sm:$0xff] %v1159
    %1184 = vst [vmem:[%s6 + $0x90] sm:$0xff] %v1160
    %1185 = vst [vmem:[%s6 + $0x98] sm:$0xff] %v1161
    %1186 = vst [vmem:[%s6 + $0xa0] sm:$0xff] %v1162
    %1187 = vst [vmem:[%s6 + $0xa8] sm:$0xff] %v1163
    %1188 = vst [vmem:[%s6 + $0xb0] sm:$0xff] %v1164
    %1189 = vst [vmem:[%s6 + $0xb8] sm:$0xff] %v1165
    %v1190 = vmax.f32 %v1142, %v1143
    %v1191 = vmax.f32 %v1146, %v1147
    %v1192 = vmax.f32 %v1150, %v1151
    %v1193 = vmax.f32 %v1154, %v1155
    %v1194 = vmax.f32 %v1158, %v1159
    %v1195 = vmax.f32 %v1162, %v1163
    %v1196 = vmax.f32 %v1144, %v1145
    %v1197 = vmax.f32 %v1148, %v1149
    %v1198 = vmax.f32 %v1152, %v1153
    %v1199 = vmax.f32 %v1156, %v1157
    %v1200 = vmax.f32 %v1160, %v1161
    %v1201 = vmax.f32 %v1164, %v1165
    %v1202 = vmax.f32 %v1190, %v1196
    %v1203 = vmax.f32 %v1191, %v1197
    %v1204 = vmax.f32 %v1192, %v1198
    %v1205 = vmax.f32 %v1193, %v1199
    %v1206 = vmax.f32 %v1194, %v1200
    %v1207 = vmax.f32 %v1195, %v1201
    %v1208 = vld [vmem:[%s3] sm:$0x3]
    %vm1209 = vcmask 392192
    %v1211 = vsel %vm1209, %v1208, 0
    %1213 = vmatprep.subr.mxu0 0.0
    %1214 = vmatpush1.msra.mxu0 %v1202
    %1215 = vmatprep.subr.mxu0 0.0
    %1216 = vmatpush1.msra.mxu0 %v1203
    %1217 = vmatprep.subr.mxu0 0.0
    %1218 = vmatpush1.msra.mxu0 %v1204
    %1219 = vmatprep.subr.mxu0 0.0
    %1220 = vmatpush1.msra.mxu0 %v1205
    %1221 = vmatprep.subr.mxu0 0.0
    %1222 = vmatpush1.msra.mxu0 %v1206
    %1223 = vmatprep.subr.mxu0 0.0
    %1224 = vmatpush1.msra.mxu0 %v1207
    %1225 = vmatprep.subr.mxu0 0.0
    %1226 = vmatpush1.msra.mxu0 0.0
    %1227 = vmatprep.subr.mxu0 0.0
    %1228 = vmatpush1.msra.mxu0 0.0
    %1229 = vmatprep.subr.mxu0 0.0
    %1230 = vmatpush1.msra.mxu0 0.0
    %1231 = vmatprep.subr.mxu0 0.0
    %1232 = vmatpush1.msra.mxu0 0.0
    %1233 = vmatprep.subr.mxu0 0.0
    %1234 = vmatpush1.msra.mxu0 0.0
    %1235 = vmatprep.subr.mxu0 0.0
    %1236 = vmatpush1.msra.mxu0 0.0
    %1237 = vmatprep.subr.mxu0 0.0
    %1238 = vmatpush1.msra.mxu0 0.0
    %1239 = vmatprep.subr.mxu0 0.0
    %1240 = vmatpush1.msra.mxu0 0.0
    %1241 = vmatprep.subr.mxu0 0.0
    %1242 = vmatpush1.msra.mxu0 0.0
    %1243 = vmatprep.subr.mxu0 0.0
    %1244 = vmatpush1.msra.mxu0 0.0
    %1245 = vmatprep.subr.mxu0 0.0
    %1246 = vmatpush1.msra.mxu0 0.0
    %1247 = vmatprep.subr.mxu0 0.0
    %1248 = vmatpush1.msra.mxu0 0.0
    %1249 = vmatprep.subr.mxu0 0.0
    %1250 = vmatpush1.msra.mxu0 0.0
    %1251 = vmatprep.subr.mxu0 0.0
    %1252 = vmatpush1.msra.mxu0 0.0
    %1253 = vmatprep.subr.mxu0 0.0
    %1254 = vmatpush1.msra.mxu0 0.0
    %1255 = vmatprep.subr.mxu0 0.0
    %1256 = vmatpush1.msra.mxu0 0.0
    %1257 = vmatprep.subr.mxu0 0.0
    %1258 = vmatpush1.msra.mxu0 0.0
    %1259 = vmatprep.subr.mxu0 0.0
    %1260 = vmatpush1.msra.mxu0 0.0
    %1261 = vmatprep.subr.mxu0 0.0
    %1262 = vmatpush1.msra.mxu0 0.0
    %1263 = vmatprep.subr.mxu0 0.0
    %1264 = vmatpush1.msra.mxu0 0.0
    %1265 = vmatprep.subr.mxu0 0.0
    %1266 = vmatpush1.msra.mxu0 0.0
    %1267 = vmatprep.subr.mxu0 0.0
    %1268 = vmatpush1.msra.mxu0 0.0
    %1269 = vmatprep.subr.mxu0 0.0
    %1270 = vmatpush1.msra.mxu0 0.0
    %1271 = vmatprep.subr.mxu0 0.0
    %1272 = vmatpush1.msra.mxu0 0.0
    %1273 = vmatprep.subr.mxu0 0.0
    %1274 = vmatpush1.msra.mxu0 0.0
    %1275 = vmatprep.subr.mxu0 0.0
    %1276 = vmatpush1.msra.mxu0 0.0
    %1277 = vmatprep.mubr.f32.mxu0 0.0
    %1278 = vmatmul.mubr.f32.gmra.mrb[0].mxu0 %v1211
    %v1279 = vpop.f32.mrb[0].mxu0
    %v1280 = vadd.f32 0.0, %v1279
    %v1281 = vpop.f32.mrb[0].mxu0
    %1282 = vdwg.mxu0
    %1283 = vst [vmem:[#allocation2] sm:$0x3] %v1280
    %v1284 = vld [vmem:[%s4] sm:$0xff]
    %v1285 = vld [vmem:[%s4 + $0x8] sm:$0xff]
    %v1286 = vld [vmem:[%s4 + $0x10] sm:$0xff]
    %v1287 = vld [vmem:[%s4 + $0x18] sm:$0xff]
    %v1288 = vld [vmem:[%s4 + $0x20] sm:$0xff]
    %v1289 = vld [vmem:[%s4 + $0x28] sm:$0xff]
    %v1290 = vld [vmem:[%s4 + $0x30] sm:$0xff]
    %v1291 = vld [vmem:[%s4 + $0x38] sm:$0xff]
    %v1292 = vld [vmem:[%s4 + $0x40] sm:$0xff]
    %v1293 = vld [vmem:[%s4 + $0x48] sm:$0xff]
    %v1294 = vld [vmem:[%s4 + $0x50] sm:$0xff]
    %v1295 = vld [vmem:[%s4 + $0x58] sm:$0xff]
    %v1296 = vld [vmem:[%s4 + $0x60] sm:$0xff]
    %v1297 = vld [vmem:[%s4 + $0x68] sm:$0xff]
    %v1298 = vld [vmem:[%s4 + $0x70] sm:$0xff]
    %v1299 = vld [vmem:[%s4 + $0x78] sm:$0xff]
    %v1300 = vld [vmem:[%s5] sm:$0x1]
    %v1302 = vlaneseq
    %v1303 = vshrl.u32 %v1302, 7
    %v1304 = vsub.s32 0, %v1303
    %v1305 = vrot.slane %v1300, %v1304
    %1307 = vmatprep.subr.mxu0 0.0
    %1308 = vmatpush1.msra.mxu0 %v1284
    %1309 = vmatprep.subr.mxu0 0.0
    %1310 = vmatpush1.msra.mxu0 %v1285
    %1311 = vmatprep.subr.mxu0 0.0
    %1312 = vmatpush1.msra.mxu0 %v1286
    %1313 = vmatprep.subr.mxu0 0.0
    %1314 = vmatpush1.msra.mxu0 %v1287
    %1315 = vmatprep.subr.mxu0 0.0
    %1316 = vmatpush1.msra.mxu0 %v1288
    %1317 = vmatprep.subr.mxu0 0.0
    %1318 = vmatpush1.msra.mxu0 %v1289
    %1319 = vmatprep.subr.mxu0 0.0
    %1320 = vmatpush1.msra.mxu0 %v1290
    %1321 = vmatprep.subr.mxu0 0.0
    %1322 = vmatpush1.msra.mxu0 %v1291
    %1323 = vmatprep.subr.mxu0 0.0
    %1324 = vmatpush1.msra.mxu0 %v1292
    %1325 = vmatprep.subr.mxu0 0.0
    %1326 = vmatpush1.msra.mxu0 %v1293
    %1327 = vmatprep.subr.mxu0 0.0
    %1328 = vmatpush1.msra.mxu0 %v1294
    %1329 = vmatprep.subr.mxu0 0.0
    %1330 = vmatpush1.msra.mxu0 %v1295
    %1331 = vmatprep.subr.mxu0 0.0
    %1332 = vmatpush1.msra.mxu0 %v1296
    %1333 = vmatprep.subr.mxu0 0.0
    %1334 = vmatpush1.msra.mxu0 %v1297
    %1335 = vmatprep.subr.mxu0 0.0
    %1336 = vmatpush1.msra.mxu0 %v1298
    %1337 = vmatprep.subr.mxu0 0.0
    %1338 = vmatpush1.msra.mxu0 %v1299
    %1339 = vmatprep.subr.mxu0 0.0
    %1340 = vmatpush1.msra.mxu0 0.0
    %1341 = vmatprep.subr.mxu0 0.0
    %1342 = vmatpush1.msra.mxu0 0.0
    %1343 = vmatprep.subr.mxu0 0.0
    %1344 = vmatpush1.msra.mxu0 0.0
    %1345 = vmatprep.subr.mxu0 0.0
    %1346 = vmatpush1.msra.mxu0 0.0
    %1347 = vmatprep.subr.mxu0 0.0
    %1348 = vmatpush1.msra.mxu0 0.0
    %1349 = vmatprep.subr.mxu0 0.0
    %1350 = vmatpush1.msra.mxu0 0.0
    %1351 = vmatprep.subr.mxu0 0.0
    %1352 = vmatpush1.msra.mxu0 0.0
    %1353 = vmatprep.subr.mxu0 0.0
    %1354 = vmatpush1.msra.mxu0 0.0
    %1355 = vmatprep.subr.mxu0 0.0
    %1356 = vmatpush1.msra.mxu0 0.0
    %1357 = vmatprep.subr.mxu0 0.0
    %1358 = vmatpush1.msra.mxu0 0.0
    %1359 = vmatprep.subr.mxu0 0.0
    %1360 = vmatpush1.msra.mxu0 0.0
    %1361 = vmatprep.subr.mxu0 0.0
    %1362 = vmatpush1.msra.mxu0 0.0
    %1363 = vmatprep.subr.mxu0 0.0
    %1364 = vmatpush1.msra.mxu0 0.0
    %1365 = vmatprep.subr.mxu0 0.0
    %1366 = vmatpush1.msra.mxu0 0.0
    %1367 = vmatprep.subr.mxu0 0.0
    %1368 = vmatpush1.msra.mxu0 0.0
    %1369 = vmatprep.subr.mxu0 0.0
    %1370 = vmatpush1.msra.mxu0 0.0
    %1371 = vmatprep.mubr.f32.mxu0 0.0
    %1372 = vmatmul.mubr.f32.gmra.mrb[0].mxu0 %v1280
    %v1373 = vpop.f32.mrb[0].mxu0
    %v1374 = vadd.f32 %v1305, %v1373
    %v1375 = vpop.f32.mrb[0].mxu0
    %1376 = vdwg.mxu0
    %1377 = vst [vmem:[#allocation4] sm:$0x3] %v1374
    // Predicated region
    $region26: #{incremental_net_forward.3} parent=1 // pred_check
      _
    $region27: #{incremental_net_forward.3} parent=1 // pred_check_branch
      %1379 = sbr.rel (0) target = $region29
    $region28: #{incremental_net_forward.3} parent=1 // pred_region
      _
    $region29: #{incremental_net_forward.3} parent=1 // pred_fallthru
      _
    // Predicated region
    $region30: #{incremental_net_forward.3} parent=1 // pred_check
      _
    $region31: #{incremental_net_forward.3} parent=1 // pred_check_branch
      %1381 = sbr.rel (0) target = $region33
    $region32: #{incremental_net_forward.3} parent=1 // pred_region
      %s1383 = ssub.s32 32, 32
      %1384 = vsyncadd [#allocation3], %s1383
      %s1386 = sshll.u32 [#allocation2], 4
      %s1387 = int_to_ptr.vmem [resolvable:$true] %s1386
      %1389 = dma.vmem_to_hbm [thread:$0]  %s1387, 32, %s7, [#allocation3]
    $region33: #{incremental_net_forward.3} parent=1 // pred_fallthru
      _
    // Predicated region
    $region34: #{incremental_net_forward.3} parent=1 // pred_check
      _
    $region35: #{incremental_net_forward.3} parent=1 // pred_check_branch
      %1391 = sbr.rel (0) target = $region37
    $region36: #{incremental_net_forward.3} parent=1 // pred_region
      %s1393 = ssub.s32 32, 32
      %1394 = vsyncadd [#allocation5], %s1393
      %s1396 = sshll.u32 [#allocation4], 4
      %s1397 = int_to_ptr.vmem [resolvable:$true] %s1396
      %1399 = dma.vmem_to_hbm [thread:$0]  %s1397, 32, %s8, [#allocation5]
    $region37: #{incremental_net_forward.3} parent=1 // pred_fallthru
      _
    // Predicated region
    $region38: #{incremental_net_forward.3} parent=1 // pred_check
      _
    $region39: #{incremental_net_forward.3} parent=1 // pred_check_branch
      %1401 = sbr.rel (0) target = $region41
    $region40: #{incremental_net_forward.3} parent=1 // pred_region
      _
    $region41: #{incremental_net_forward.3} parent=1 // pred_fallthru
      _
    // Predicated region
    $region42: #{incremental_net_forward.3} parent=1 // pred_check
      _
    $region43: #{incremental_net_forward.3} parent=1 // pred_check_branch
      %1403 = sbr.rel (0) target = $region45
    $region44: #{incremental_net_forward.3} parent=1 // pred_region
      %1404 = dma.done [#allocation3], 32
    $region45: #{incremental_net_forward.3} parent=1 // pred_fallthru
      _
    // Predicated region
    $region46: #{incremental_net_forward.3} parent=1 // pred_check
      _
    $region47: #{incremental_net_forward.3} parent=1 // pred_check_branch
      %1406 = sbr.rel (0) target = $region49
    $region48: #{incremental_net_forward.3} parent=1 // pred_region
      %1407 = dma.done [#allocation5], 32
    $region49: #{incremental_net_forward.3} parent=1 // pred_fallthru
      _
    %1408 = vsyncpa [#allocation3], 1
    %1409 = vsyncpa [#allocation5], 1

</llo_original>
